<compile_context>
chip_gen: v6e
topology: v6e:2x2x1
jax: 0.10.0
libtpu: 0.0.40
codegen_flags: <defaults>
</compile_context>

<pallas_src>
import jax
import jax.numpy as jnp
import numpy as np
from jax.experimental import pallas as pl
from jax.experimental.pallas import tpu as pltpu


def _reorder_gates(w, H):
    """PyTorch gate order (i, f, g, o) -> kernel order (i, f, o, g) along axis 0."""
    return jnp.concatenate([w[:2 * H], w[3 * H:4 * H], w[2 * H:3 * H]], axis=0)


def bilstm_classifier(sentence, params, *, batch_block=None):
    """Pallas-backed forward pass. sentence: (T, B) int32."""
    T, B = sentence.shape
    emb = params["embedding"]                        # (V, E)
    E = emb.shape[1]
    H = params["whh_f"].shape[1]                     # per-direction hidden
    C = params["b_out"].shape[0]
    G = 4 * H                                        # gates per direction
    C_pad = max(128, -(-C // 128) * 128)             # lane-dense output width

    # ---- batch tile selection (review: BB up to 128, VMEM-bounded) -------
    B8 = -(-B // 8) * 8
    if batch_block is None:
        BB = min(128, B8)
        # Hoisted xw slab (f32) + double-buffered bf16 x tiles under ~24 MiB
        # so a single tile fits v7x's 64 MiB physical VMEM with headroom.
        while BB > 8 and T * BB * (2 * G * 4 + 2 * E * 2) > 24 * 2**20:
            BB //= 2
    else:
        BB = -(-batch_block // 8) * 8
    # TODO(synk): on v7x (2 TensorCores) prefer BB such that n_tiles >= 2 so
    # the "parallel" batch axis actually shards across both cores.
    n_tiles = -(-B // BB)
    B_pad = n_tiles * BB
    if B_pad != B:
        sentence = jnp.pad(sentence, ((0, 0), (0, B_pad - B)))  # pad token 0

    # ---- gather fused with tile layout (permute ids, not activations) ----
    ids = (sentence.reshape(T, n_tiles, BB)
                   .transpose(1, 0, 2)
                   .reshape(n_tiles, T * BB))
    x = jnp.take(emb.astype(jnp.bfloat16), ids, axis=0)   # (n_tiles, T*BB, E)

    # ---- weights: kernel gate order (i, f, o, g), lane-dense combined ----
    # fwd gates in lanes [0, 4H), bwd gates in [4H, 8H) -> 128 lanes for H=16.
    wih = jnp.concatenate(
        [_reorder_gates(params["wih_f"], H).T,
         _reorder_gates(params["wih_b"], H).T], axis=1).astype(jnp.bfloat16)
    b_g = jnp.concatenate(
        [_reorder_gates(params["bih_f"] + params["bhh_f"], H),
         _reorder_gates(params["bih_b"] + params["bhh_b"], H)]
    ).reshape(1, 2 * G).astype(jnp.float32)
    whh = _reorder_gates(params["whh_f"], H).T.astype(jnp.float32)   # (H, 4H)

    w_out = params["w_out"]                                          # (C, 2H)
    wout_f = jnp.zeros((H, C_pad), jnp.float32).at[:, :C].set(w_out[:, :H].T)
    wout_b = jnp.zeros((H, C_pad), jnp.float32).at[:, :C].set(w_out[:, H:].T)
    # Pad-lane bias = -1e30 so padded class lanes contribute 0 to the softmax.
    b_out = jnp.full((1, C_pad), -1e30, jnp.float32).at[0, :C].set(
        params["b_out"].astype(jnp.float32))

    def kernel(x_ref, wih_ref, bg_ref, whh_ref, wf_ref, wb_ref, bo_ref, out_ref):
        # Hoisted input projection: ONE bf16 MXU matmul covering BOTH
        # directions' gate projections (f32 accumulate), bias folded in once.
        xw = (jnp.dot(x_ref[0], wih_ref[...],
                      preferred_element_type=jnp.float32)
              + bg_ref[...])                                    # (T*BB, 8H)

        # Lane slices hoisted out of the recurrence (review item): the time
        # loop only takes cheap BB-aligned sublane slices of xw_f.
        xw_f = xw[:, :G]                                        # fwd gates, all T
        xw_b_last = xw[(T - 1) * BB:T * BB, G:]                 # bwd gates, t=T-1

        whh_v = whh_ref[...]

        def act(gates, c):
            # Gate order (i, f, o, g): one sigmoid over a contiguous (BB, 3H)
            # block + one tanh over (BB, H) instead of four sub-vreg calls.
            sig = jax.nn.sigmoid(gates[:, :3 * H])
            g = jnp.tanh(gates[:, 3 * H:])
            i = sig[:, :H]
            f = sig[:, H:2 * H]
            o = sig[:, 2 * H:]
            c_new = f * c + i * g
            return o * jnp.tanh(c_new), c_new

        h = jnp.zeros((BB, H), jnp.float32)
        c = jnp.zeros((BB, H), jnp.float32)

        # Fully-unrolled forward recurrence; the serial chain carries only the
        # tiny h @ whh matmul plus the two fused activation calls per step.
        # TODO(synk): for large T switch to lax.fori_loop(..., unroll=k) over a
        #   VMEM-resident xw_f to bound vreg live ranges, and keep whh resident
        #   in the MXU via pltpu.matmul_push_rhs / matmul_acc_lhs / matmul_pop.
        for t in range(T):
            gates = xw_f[t * BB:(t + 1) * BB] + jnp.dot(
                h, whh_v, preferred_element_type=jnp.float32)
            h, c = act(gates, c)

        # Backward direction at the last timestep == first step of the
        # reversed scan from zero state, so its h @ whh_b term is identically
        # zero: the gates are just the precomputed input projection.
        h_b, _ = act(xw_b_last, jnp.zeros((BB, H), jnp.float32))

        # hidden2class into a lane-dense (BB, C_pad) tile.
        logits = (jnp.dot(h, wf_ref[...], preferred_element_type=jnp.float32)
                  + jnp.dot(h_b, wb_ref[...], preferred_element_type=jnp.float32)
                  + bo_ref[...])

        # log_softmax over classes; padded lanes carry -1e30 bias -> exp == 0,
        # so max / sum reduce over the real classes only.
        m = jnp.max(logits, axis=1, keepdims=True)
        z = logits - m
        out_ref[...] = z - jnp.log(jnp.sum(jnp.exp(z), axis=1, keepdims=True))

    # Explicit VMEM budget (review item): cover the hoisted xw slab, the
    # double-buffered bf16 x tiles, weights and the output tile with headroom.
    est_bytes = (2 * T * BB * E * 2          # double-buffered bf16 x tiles
                 + T * BB * 2 * G * 4        # hoisted xw slab (f32)
                 + 2 * BB * C_pad * 4        # double-buffered output tile
                 + (E * 2 * G) * 2           # wih (bf16)
                 + (2 * G + H * G + 2 * H * C_pad + C_pad) * 4)
    vmem_limit = int(min(48 * 2**20, max(32 * 2**20, 4 * est_bytes)))

    out = pl.pallas_call(
        kernel,
        out_shape=jax.ShapeDtypeStruct((B_pad, C_pad), jnp.float32),
        grid=(n_tiles,),
        in_specs=[
            pl.BlockSpec((1, T * BB, E), lambda i: (i, 0, 0)),   # x tile (bf16)
            pl.BlockSpec((E, 2 * G), lambda i: (0, 0)),          # combined W_ih
            pl.BlockSpec((1, 2 * G), lambda i: (0, 0)),          # folded gate bias
            pl.BlockSpec((H, G), lambda i: (0, 0)),              # W_hh (fwd)
            pl.BlockSpec((H, C_pad), lambda i: (0, 0)),          # W_out fwd half
            pl.BlockSpec((H, C_pad), lambda i: (0, 0)),          # W_out bwd half
            pl.BlockSpec((1, C_pad), lambda i: (0, 0)),          # b_out (padded)
        ],
        out_specs=pl.BlockSpec((BB, C_pad), lambda i: (i, 0)),
        compiler_params=pltpu.CompilerParams(
            dimension_semantics=("parallel",),
            vmem_limit_bytes=vmem_limit),
    )(x, wih, b_g, whh, wout_f, wout_b, b_out)

    return out[:B, :C]


def _reference(sentence, params):
    """Pure-JAX f32 reference mirroring PyTorch semantics (sanity check)."""
    T, B = sentence.shape
    H = params["whh_f"].shape[1]
    x = jnp.take(params["embedding"], sentence, axis=0)

    def cell(x_t, h, c, wih, whh, bih, bhh):
        gates = x_t @ wih.T + bih + h @ whh.T + bhh
        i = jax.nn.sigmoid(gates[:, :H])
        f = jax.nn.sigmoid(gates[:, H:2 * H])
        g = jnp.tanh(gates[:, 2 * H:3 * H])
        o = jax.nn.sigmoid(gates[:, 3 * H:])
        c = f * c + i * g
        return o * jnp.tanh(c), c

    h = c = jnp.zeros((B, H), jnp.float32)
    for t in range(T):
        h, c = cell(x[t], h, c, params["wih_f"], params["whh_f"],
                    params["bih_f"], params["bhh_f"])
    hb, _ = cell(x[T - 1], jnp.zeros((B, H)), jnp.zeros((B, H)),
                 params["wih_b"], params["whh_b"],
                 params["bih_b"], params["bhh_b"])
    logits = jnp.concatenate([h, hb], axis=1) @ params["w_out"].T + params["b_out"]
    return jax.nn.log_softmax(logits, axis=1)


def init_params(key, vocab_size, embedding_dim, hidden_dim, num_classes):
    H = hidden_dim // 2
    ks = jax.random.split(key, 12)
    k_lstm = 1.0 / np.sqrt(H)
    k_lin = 1.0 / np.sqrt(hidden_dim)
    u = lambda k, shape, s: jax.random.uniform(k, shape, jnp.float32, -s, s)
    return {
        "embedding": jax.random.normal(ks[0], (vocab_size, embedding_dim), jnp.float32),
        # forward direction
        "wih_f": u(ks[1], (4 * H, embedding_dim), k_lstm),
        "whh_f": u(ks[2], (4 * H, H), k_lstm),
        "bih_f": u(ks[3], (4 * H,), k_lstm),
        "bhh_f": u(ks[4], (4 * H,), k_lstm),
        # backward direction
        "wih_b": u(ks[5], (4 * H, embedding_dim), k_lstm),
        "whh_b": u(ks[6], (4 * H, H), k_lstm),
        "bih_b": u(ks[7], (4 * H,), k_lstm),
        "bhh_b": u(ks[8], (4 * H,), k_lstm),
        # hidden2class
        "w_out": u(ks[9], (num_classes, hidden_dim), k_lin),
        "b_out": u(ks[10], (num_classes,), k_lin),
    }


if __name__ == "__main__":
    embedding_dim = 16
    hidden_dim = 32          # -> per-direction hidden = 16 (both dirs' gates = 128 lanes)
    vocab_size = 50
    batch_size = 8
    seq_len = 8
    num_classes = 2

    key = jax.random.PRNGKey(0)
    pkey, skey = jax.random.split(key)
    params = init_params(pkey, vocab_size, embedding_dim, hidden_dim, num_classes)
    sentence = jax.random.randint(skey, (seq_len, batch_size), 0, vocab_size,
                                  dtype=jnp.int32)

    out = bilstm_classifier(sentence, params)
    out = jax.block_until_ready(out)

    ref = jax.block_until_ready(_reference(sentence, params))
    assert out.shape == (batch_size, num_classes)
    # Tolerance loosened vs. the f32 reference because the hoisted input
    # projection runs in bf16 (recurrence / softmax stay f32).
    np.testing.assert_allclose(np.asarray(out), np.asarray(ref),
                               rtol=3e-2, atol=3e-2)
    print("KERNEL_OK")
</pallas_src>

<mosaic_0001>
module attributes {stable_mosaic.version = 11 : i64} {
  func.func @kernel(%arg0: i32, %arg1: memref<1x64x16xbf16, #tpu.memory_space<vmem>>, %arg2: memref<16x128xbf16, #tpu.memory_space<vmem>>, %arg3: memref<1x128xf32, #tpu.memory_space<vmem>>, %arg4: memref<16x64xf32, #tpu.memory_space<vmem>>, %arg5: memref<16x128xf32, #tpu.memory_space<vmem>>, %arg6: memref<16x128xf32, #tpu.memory_space<vmem>>, %arg7: memref<1x128xf32, #tpu.memory_space<vmem>>, %arg8: memref<8x128xf32, #tpu.memory_space<vmem>>) attributes {dimension_semantics = [#tpu.dimension_semantics<parallel>], iteration_bounds = array<i64: 1>, scalar_prefetch = 0 : i64, scratch_operands = 0 : i64, tpu.core_type = #tpu.core_type<tc>, window_params = [{transform_indices = @transform_0, window_bounds = array<i64: 1, 64, 16>}, {pipeline_mode = #tpu.pipeline_mode<synchronous>, transform_indices = @transform_1, window_bounds = array<i64: 16, 128>}, {pipeline_mode = #tpu.pipeline_mode<synchronous>, transform_indices = @transform_2, window_bounds = array<i64: 1, 128>}, {pipeline_mode = #tpu.pipeline_mode<synchronous>, transform_indices = @transform_3, window_bounds = array<i64: 16, 64>}, {pipeline_mode = #tpu.pipeline_mode<synchronous>, transform_indices = @transform_4, window_bounds = array<i64: 16, 128>}, {pipeline_mode = #tpu.pipeline_mode<synchronous>, transform_indices = @transform_5, window_bounds = array<i64: 16, 128>}, {pipeline_mode = #tpu.pipeline_mode<synchronous>, transform_indices = @transform_6, window_bounds = array<i64: 1, 128>}, {transform_indices = @transform_7, window_bounds = array<i64: 8, 128>}]} {
    %c0 = arith.constant 0 : index
    %c0_0 = arith.constant 0 : index
    %c0_1 = arith.constant 0 : index
    %0 = vector.load %arg1[%c0, %c0_0, %c0_1] : memref<1x64x16xbf16, #tpu.memory_space<vmem>>, vector<1x64x16xbf16>
    %1 = vector.shape_cast %0 : vector<1x64x16xbf16> to vector<64x16xbf16>
    %c0_2 = arith.constant 0 : index
    %c0_3 = arith.constant 0 : index
    %2 = vector.load %arg2[%c0_2, %c0_3] : memref<16x128xbf16, #tpu.memory_space<vmem>>, vector<16x128xbf16>
    %cst = arith.constant dense<0.000000e+00> : vector<64x128xf32>
    %3 = tpu.matmul %1, %2, %cst {dimension_numbers = #tpu.dot_dimension_numbers<[1], [0], [0], [1], [0, 0, 1, 1], [], []>} : vector<64x16xbf16>, vector<16x128xbf16>, vector<64x128xf32> -> vector<64x128xf32>
    %c0_4 = arith.constant 0 : index
    %c0_5 = arith.constant 0 : index
    %4 = vector.load %arg3[%c0_4, %c0_5] : memref<1x128xf32, #tpu.memory_space<vmem>>, vector<1x128xf32>
    %5 = vector.broadcast %4 : vector<1x128xf32> to vector<64x128xf32>
    %6 = arith.addf %3, %5 : vector<64x128xf32>
    %7 = vector.extract_strided_slice %6 {offsets = [0, 0], sizes = [64, 64], strides = [1, 1]} : vector<64x128xf32> to vector<64x64xf32>
    %8 = vector.extract_strided_slice %6 {offsets = [56, 64], sizes = [8, 64], strides = [1, 1]} : vector<64x128xf32> to vector<8x64xf32>
    %c0_6 = arith.constant 0 : index
    %c0_7 = arith.constant 0 : index
    %9 = vector.load %arg4[%c0_6, %c0_7] : memref<16x64xf32, #tpu.memory_space<vmem>>, vector<16x64xf32>
    %cst_8 = arith.constant 0.000000e+00 : f32
    %10 = vector.broadcast %cst_8 : f32 to vector<8x16xf32>
    %cst_9 = arith.constant 0.000000e+00 : f32
    %11 = vector.broadcast %cst_9 : f32 to vector<8x16xf32>
    %12 = vector.extract_strided_slice %7 {offsets = [0, 0], sizes = [8, 64], strides = [1, 1]} : vector<64x64xf32> to vector<8x64xf32>
    %cst_10 = arith.constant dense<0.000000e+00> : vector<8x64xf32>
    %13 = tpu.matmul %10, %9, %cst_10 {dimension_numbers = #tpu.dot_dimension_numbers<[1], [0], [0], [1], [0, 0, 1, 1], [], []>} : vector<8x16xf32>, vector<16x64xf32>, vector<8x64xf32> -> vector<8x64xf32>
    %14 = arith.addf %12, %13 : vector<8x64xf32>
    %15 = vector.extract_strided_slice %14 {offsets = [0, 0], sizes = [8, 48], strides = [1, 1]} : vector<8x64xf32> to vector<8x48xf32>
    %16 = arith.negf %15 : vector<8x48xf32>
    %17 = math.exp %16 : vector<8x48xf32>
    %cst_11 = arith.constant 1.000000e+00 : f32
    %18 = vector.broadcast %cst_11 : f32 to vector<8x48xf32>
    %19 = arith.addf %18, %17 : vector<8x48xf32>
    %20 = arith.divf %18, %19 : vector<8x48xf32>
    %21 = vector.extract_strided_slice %14 {offsets = [0, 48], sizes = [8, 16], strides = [1, 1]} : vector<8x64xf32> to vector<8x16xf32>
    %22 = math.tanh %21 : vector<8x16xf32>
    %23 = vector.extract_strided_slice %20 {offsets = [0, 0], sizes = [8, 16], strides = [1, 1]} : vector<8x48xf32> to vector<8x16xf32>
    %24 = vector.extract_strided_slice %20 {offsets = [0, 16], sizes = [8, 16], strides = [1, 1]} : vector<8x48xf32> to vector<8x16xf32>
    %25 = vector.extract_strided_slice %20 {offsets = [0, 32], sizes = [8, 16], strides = [1, 1]} : vector<8x48xf32> to vector<8x16xf32>
    %26 = arith.mulf %24, %11 : vector<8x16xf32>
    %27 = arith.mulf %23, %22 : vector<8x16xf32>
    %28 = arith.addf %26, %27 : vector<8x16xf32>
    %29 = math.tanh %28 : vector<8x16xf32>
    %30 = arith.mulf %25, %29 : vector<8x16xf32>
    %31 = vector.extract_strided_slice %7 {offsets = [8, 0], sizes = [8, 64], strides = [1, 1]} : vector<64x64xf32> to vector<8x64xf32>
    %cst_12 = arith.constant dense<0.000000e+00> : vector<8x64xf32>
    %32 = tpu.matmul %30, %9, %cst_12 {dimension_numbers = #tpu.dot_dimension_numbers<[1], [0], [0], [1], [0, 0, 1, 1], [], []>} : vector<8x16xf32>, vector<16x64xf32>, vector<8x64xf32> -> vector<8x64xf32>
    %33 = arith.addf %31, %32 : vector<8x64xf32>
    %34 = vector.extract_strided_slice %33 {offsets = [0, 0], sizes = [8, 48], strides = [1, 1]} : vector<8x64xf32> to vector<8x48xf32>
    %35 = arith.negf %34 : vector<8x48xf32>
    %36 = math.exp %35 : vector<8x48xf32>
    %cst_13 = arith.constant 1.000000e+00 : f32
    %37 = vector.broadcast %cst_13 : f32 to vector<8x48xf32>
    %38 = arith.addf %37, %36 : vector<8x48xf32>
    %39 = arith.divf %37, %38 : vector<8x48xf32>
    %40 = vector.extract_strided_slice %33 {offsets = [0, 48], sizes = [8, 16], strides = [1, 1]} : vector<8x64xf32> to vector<8x16xf32>
    %41 = math.tanh %40 : vector<8x16xf32>
    %42 = vector.extract_strided_slice %39 {offsets = [0, 0], sizes = [8, 16], strides = [1, 1]} : vector<8x48xf32> to vector<8x16xf32>
    %43 = vector.extract_strided_slice %39 {offsets = [0, 16], sizes = [8, 16], strides = [1, 1]} : vector<8x48xf32> to vector<8x16xf32>
    %44 = vector.extract_strided_slice %39 {offsets = [0, 32], sizes = [8, 16], strides = [1, 1]} : vector<8x48xf32> to vector<8x16xf32>
    %45 = arith.mulf %43, %28 : vector<8x16xf32>
    %46 = arith.mulf %42, %41 : vector<8x16xf32>
    %47 = arith.addf %45, %46 : vector<8x16xf32>
    %48 = math.tanh %47 : vector<8x16xf32>
    %49 = arith.mulf %44, %48 : vector<8x16xf32>
    %50 = vector.extract_strided_slice %7 {offsets = [16, 0], sizes = [8, 64], strides = [1, 1]} : vector<64x64xf32> to vector<8x64xf32>
    %cst_14 = arith.constant dense<0.000000e+00> : vector<8x64xf32>
    %51 = tpu.matmul %49, %9, %cst_14 {dimension_numbers = #tpu.dot_dimension_numbers<[1], [0], [0], [1], [0, 0, 1, 1], [], []>} : vector<8x16xf32>, vector<16x64xf32>, vector<8x64xf32> -> vector<8x64xf32>
    %52 = arith.addf %50, %51 : vector<8x64xf32>
    %53 = vector.extract_strided_slice %52 {offsets = [0, 0], sizes = [8, 48], strides = [1, 1]} : vector<8x64xf32> to vector<8x48xf32>
    %54 = arith.negf %53 : vector<8x48xf32>
    %55 = math.exp %54 : vector<8x48xf32>
    %cst_15 = arith.constant 1.000000e+00 : f32
    %56 = vector.broadcast %cst_15 : f32 to vector<8x48xf32>
    %57 = arith.addf %56, %55 : vector<8x48xf32>
    %58 = arith.divf %56, %57 : vector<8x48xf32>
    %59 = vector.extract_strided_slice %52 {offsets = [0, 48], sizes = [8, 16], strides = [1, 1]} : vector<8x64xf32> to vector<8x16xf32>
    %60 = math.tanh %59 : vector<8x16xf32>
    %61 = vector.extract_strided_slice %58 {offsets = [0, 0], sizes = [8, 16], strides = [1, 1]} : vector<8x48xf32> to vector<8x16xf32>
    %62 = vector.extract_strided_slice %58 {offsets = [0, 16], sizes = [8, 16], strides = [1, 1]} : vector<8x48xf32> to vector<8x16xf32>
    %63 = vector.extract_strided_slice %58 {offsets = [0, 32], sizes = [8, 16], strides = [1, 1]} : vector<8x48xf32> to vector<8x16xf32>
    %64 = arith.mulf %62, %47 : vector<8x16xf32>
    %65 = arith.mulf %61, %60 : vector<8x16xf32>
    %66 = arith.addf %64, %65 : vector<8x16xf32>
    %67 = math.tanh %66 : vector<8x16xf32>
    %68 = arith.mulf %63, %67 : vector<8x16xf32>
    %69 = vector.extract_strided_slice %7 {offsets = [24, 0], sizes = [8, 64], strides = [1, 1]} : vector<64x64xf32> to vector<8x64xf32>
    %cst_16 = arith.constant dense<0.000000e+00> : vector<8x64xf32>
    %70 = tpu.matmul %68, %9, %cst_16 {dimension_numbers = #tpu.dot_dimension_numbers<[1], [0], [0], [1], [0, 0, 1, 1], [], []>} : vector<8x16xf32>, vector<16x64xf32>, vector<8x64xf32> -> vector<8x64xf32>
    %71 = arith.addf %69, %70 : vector<8x64xf32>
    %72 = vector.extract_strided_slice %71 {offsets = [0, 0], sizes = [8, 48], strides = [1, 1]} : vector<8x64xf32> to vector<8x48xf32>
    %73 = arith.negf %72 : vector<8x48xf32>
    %74 = math.exp %73 : vector<8x48xf32>
    %cst_17 = arith.constant 1.000000e+00 : f32
    %75 = vector.broadcast %cst_17 : f32 to vector<8x48xf32>
    %76 = arith.addf %75, %74 : vector<8x48xf32>
    %77 = arith.divf %75, %76 : vector<8x48xf32>
    %78 = vector.extract_strided_slice %71 {offsets = [0, 48], sizes = [8, 16], strides = [1, 1]} : vector<8x64xf32> to vector<8x16xf32>
    %79 = math.tanh %78 : vector<8x16xf32>
    %80 = vector.extract_strided_slice %77 {offsets = [0, 0], sizes = [8, 16], strides = [1, 1]} : vector<8x48xf32> to vector<8x16xf32>
    %81 = vector.extract_strided_slice %77 {offsets = [0, 16], sizes = [8, 16], strides = [1, 1]} : vector<8x48xf32> to vector<8x16xf32>
    %82 = vector.extract_strided_slice %77 {offsets = [0, 32], sizes = [8, 16], strides = [1, 1]} : vector<8x48xf32> to vector<8x16xf32>
    %83 = arith.mulf %81, %66 : vector<8x16xf32>
    %84 = arith.mulf %80, %79 : vector<8x16xf32>
    %85 = arith.addf %83, %84 : vector<8x16xf32>
    %86 = math.tanh %85 : vector<8x16xf32>
    %87 = arith.mulf %82, %86 : vector<8x16xf32>
    %88 = vector.extract_strided_slice %7 {offsets = [32, 0], sizes = [8, 64], strides = [1, 1]} : vector<64x64xf32> to vector<8x64xf32>
    %cst_18 = arith.constant dense<0.000000e+00> : vector<8x64xf32>
    %89 = tpu.matmul %87, %9, %cst_18 {dimension_numbers = #tpu.dot_dimension_numbers<[1], [0], [0], [1], [0, 0, 1, 1], [], []>} : vector<8x16xf32>, vector<16x64xf32>, vector<8x64xf32> -> vector<8x64xf32>
    %90 = arith.addf %88, %89 : vector<8x64xf32>
    %91 = vector.extract_strided_slice %90 {offsets = [0, 0], sizes = [8, 48], strides = [1, 1]} : vector<8x64xf32> to vector<8x48xf32>
    %92 = arith.negf %91 : vector<8x48xf32>
    %93 = math.exp %92 : vector<8x48xf32>
    %cst_19 = arith.constant 1.000000e+00 : f32
    %94 = vector.broadcast %cst_19 : f32 to vector<8x48xf32>
    %95 = arith.addf %94, %93 : vector<8x48xf32>
    %96 = arith.divf %94, %95 : vector<8x48xf32>
    %97 = vector.extract_strided_slice %90 {offsets = [0, 48], sizes = [8, 16], strides = [1, 1]} : vector<8x64xf32> to vector<8x16xf32>
    %98 = math.tanh %97 : vector<8x16xf32>
    %99 = vector.extract_strided_slice %96 {offsets = [0, 0], sizes = [8, 16], strides = [1, 1]} : vector<8x48xf32> to vector<8x16xf32>
    %100 = vector.extract_strided_slice %96 {offsets = [0, 16], sizes = [8, 16], strides = [1, 1]} : vector<8x48xf32> to vector<8x16xf32>
    %101 = vector.extract_strided_slice %96 {offsets = [0, 32], sizes = [8, 16], strides = [1, 1]} : vector<8x48xf32> to vector<8x16xf32>
    %102 = arith.mulf %100, %85 : vector<8x16xf32>
    %103 = arith.mulf %99, %98 : vector<8x16xf32>
    %104 = arith.addf %102, %103 : vector<8x16xf32>
    %105 = math.tanh %104 : vector<8x16xf32>
    %106 = arith.mulf %101, %105 : vector<8x16xf32>
    %107 = vector.extract_strided_slice %7 {offsets = [40, 0], sizes = [8, 64], strides = [1, 1]} : vector<64x64xf32> to vector<8x64xf32>
    %cst_20 = arith.constant dense<0.000000e+00> : vector<8x64xf32>
    %108 = tpu.matmul %106, %9, %cst_20 {dimension_numbers = #tpu.dot_dimension_numbers<[1], [0], [0], [1], [0, 0, 1, 1], [], []>} : vector<8x16xf32>, vector<16x64xf32>, vector<8x64xf32> -> vector<8x64xf32>
    %109 = arith.addf %107, %108 : vector<8x64xf32>
    %110 = vector.extract_strided_slice %109 {offsets = [0, 0], sizes = [8, 48], strides = [1, 1]} : vector<8x64xf32> to vector<8x48xf32>
    %111 = arith.negf %110 : vector<8x48xf32>
    %112 = math.exp %111 : vector<8x48xf32>
    %cst_21 = arith.constant 1.000000e+00 : f32
    %113 = vector.broadcast %cst_21 : f32 to vector<8x48xf32>
    %114 = arith.addf %113, %112 : vector<8x48xf32>
    %115 = arith.divf %113, %114 : vector<8x48xf32>
    %116 = vector.extract_strided_slice %109 {offsets = [0, 48], sizes = [8, 16], strides = [1, 1]} : vector<8x64xf32> to vector<8x16xf32>
    %117 = math.tanh %116 : vector<8x16xf32>
    %118 = vector.extract_strided_slice %115 {offsets = [0, 0], sizes = [8, 16], strides = [1, 1]} : vector<8x48xf32> to vector<8x16xf32>
    %119 = vector.extract_strided_slice %115 {offsets = [0, 16], sizes = [8, 16], strides = [1, 1]} : vector<8x48xf32> to vector<8x16xf32>
    %120 = vector.extract_strided_slice %115 {offsets = [0, 32], sizes = [8, 16], strides = [1, 1]} : vector<8x48xf32> to vector<8x16xf32>
    %121 = arith.mulf %119, %104 : vector<8x16xf32>
    %122 = arith.mulf %118, %117 : vector<8x16xf32>
    %123 = arith.addf %121, %122 : vector<8x16xf32>
    %124 = math.tanh %123 : vector<8x16xf32>
    %125 = arith.mulf %120, %124 : vector<8x16xf32>
    %126 = vector.extract_strided_slice %7 {offsets = [48, 0], sizes = [8, 64], strides = [1, 1]} : vector<64x64xf32> to vector<8x64xf32>
    %cst_22 = arith.constant dense<0.000000e+00> : vector<8x64xf32>
    %127 = tpu.matmul %125, %9, %cst_22 {dimension_numbers = #tpu.dot_dimension_numbers<[1], [0], [0], [1], [0, 0, 1, 1], [], []>} : vector<8x16xf32>, vector<16x64xf32>, vector<8x64xf32> -> vector<8x64xf32>
    %128 = arith.addf %126, %127 : vector<8x64xf32>
    %129 = vector.extract_strided_slice %128 {offsets = [0, 0], sizes = [8, 48], strides = [1, 1]} : vector<8x64xf32> to vector<8x48xf32>
    %130 = arith.negf %129 : vector<8x48xf32>
    %131 = math.exp %130 : vector<8x48xf32>
    %cst_23 = arith.constant 1.000000e+00 : f32
    %132 = vector.broadcast %cst_23 : f32 to vector<8x48xf32>
    %133 = arith.addf %132, %131 : vector<8x48xf32>
    %134 = arith.divf %132, %133 : vector<8x48xf32>
    %135 = vector.extract_strided_slice %128 {offsets = [0, 48], sizes = [8, 16], strides = [1, 1]} : vector<8x64xf32> to vector<8x16xf32>
    %136 = math.tanh %135 : vector<8x16xf32>
    %137 = vector.extract_strided_slice %134 {offsets = [0, 0], sizes = [8, 16], strides = [1, 1]} : vector<8x48xf32> to vector<8x16xf32>
    %138 = vector.extract_strided_slice %134 {offsets = [0, 16], sizes = [8, 16], strides = [1, 1]} : vector<8x48xf32> to vector<8x16xf32>
    %139 = vector.extract_strided_slice %134 {offsets = [0, 32], sizes = [8, 16], strides = [1, 1]} : vector<8x48xf32> to vector<8x16xf32>
    %140 = arith.mulf %138, %123 : vector<8x16xf32>
    %141 = arith.mulf %137, %136 : vector<8x16xf32>
    %142 = arith.addf %140, %141 : vector<8x16xf32>
    %143 = math.tanh %142 : vector<8x16xf32>
    %144 = arith.mulf %139, %143 : vector<8x16xf32>
    %145 = vector.extract_strided_slice %7 {offsets = [56, 0], sizes = [8, 64], strides = [1, 1]} : vector<64x64xf32> to vector<8x64xf32>
    %cst_24 = arith.constant dense<0.000000e+00> : vector<8x64xf32>
    %146 = tpu.matmul %144, %9, %cst_24 {dimension_numbers = #tpu.dot_dimension_numbers<[1], [0], [0], [1], [0, 0, 1, 1], [], []>} : vector<8x16xf32>, vector<16x64xf32>, vector<8x64xf32> -> vector<8x64xf32>
    %147 = arith.addf %145, %146 : vector<8x64xf32>
    %148 = vector.extract_strided_slice %147 {offsets = [0, 0], sizes = [8, 48], strides = [1, 1]} : vector<8x64xf32> to vector<8x48xf32>
    %149 = arith.negf %148 : vector<8x48xf32>
    %150 = math.exp %149 : vector<8x48xf32>
    %cst_25 = arith.constant 1.000000e+00 : f32
    %151 = vector.broadcast %cst_25 : f32 to vector<8x48xf32>
    %152 = arith.addf %151, %150 : vector<8x48xf32>
    %153 = arith.divf %151, %152 : vector<8x48xf32>
    %154 = vector.extract_strided_slice %147 {offsets = [0, 48], sizes = [8, 16], strides = [1, 1]} : vector<8x64xf32> to vector<8x16xf32>
    %155 = math.tanh %154 : vector<8x16xf32>
    %156 = vector.extract_strided_slice %153 {offsets = [0, 0], sizes = [8, 16], strides = [1, 1]} : vector<8x48xf32> to vector<8x16xf32>
    %157 = vector.extract_strided_slice %153 {offsets = [0, 16], sizes = [8, 16], strides = [1, 1]} : vector<8x48xf32> to vector<8x16xf32>
    %158 = vector.extract_strided_slice %153 {offsets = [0, 32], sizes = [8, 16], strides = [1, 1]} : vector<8x48xf32> to vector<8x16xf32>
    %159 = arith.mulf %157, %142 : vector<8x16xf32>
    %160 = arith.mulf %156, %155 : vector<8x16xf32>
    %161 = arith.addf %159, %160 : vector<8x16xf32>
    %162 = math.tanh %161 : vector<8x16xf32>
    %163 = arith.mulf %158, %162 : vector<8x16xf32>
    %cst_26 = arith.constant 0.000000e+00 : f32
    %164 = vector.broadcast %cst_26 : f32 to vector<8x16xf32>
    %165 = vector.extract_strided_slice %8 {offsets = [0, 0], sizes = [8, 48], strides = [1, 1]} : vector<8x64xf32> to vector<8x48xf32>
    %166 = arith.negf %165 : vector<8x48xf32>
    %167 = math.exp %166 : vector<8x48xf32>
    %cst_27 = arith.constant 1.000000e+00 : f32
    %168 = vector.broadcast %cst_27 : f32 to vector<8x48xf32>
    %169 = arith.addf %168, %167 : vector<8x48xf32>
    %170 = arith.divf %168, %169 : vector<8x48xf32>
    %171 = vector.extract_strided_slice %8 {offsets = [0, 48], sizes = [8, 16], strides = [1, 1]} : vector<8x64xf32> to vector<8x16xf32>
    %172 = math.tanh %171 : vector<8x16xf32>
    %173 = vector.extract_strided_slice %170 {offsets = [0, 0], sizes = [8, 16], strides = [1, 1]} : vector<8x48xf32> to vector<8x16xf32>
    %174 = vector.extract_strided_slice %170 {offsets = [0, 16], sizes = [8, 16], strides = [1, 1]} : vector<8x48xf32> to vector<8x16xf32>
    %175 = vector.extract_strided_slice %170 {offsets = [0, 32], sizes = [8, 16], strides = [1, 1]} : vector<8x48xf32> to vector<8x16xf32>
    %176 = arith.mulf %174, %164 : vector<8x16xf32>
    %177 = arith.mulf %173, %172 : vector<8x16xf32>
    %178 = arith.addf %176, %177 : vector<8x16xf32>
    %179 = math.tanh %178 : vector<8x16xf32>
    %180 = arith.mulf %175, %179 : vector<8x16xf32>
    %c0_28 = arith.constant 0 : index
    %c0_29 = arith.constant 0 : index
    %181 = vector.load %arg5[%c0_28, %c0_29] : memref<16x128xf32, #tpu.memory_space<vmem>>, vector<16x128xf32>
    %cst_30 = arith.constant dense<0.000000e+00> : vector<8x128xf32>
    %182 = tpu.matmul %163, %181, %cst_30 {dimension_numbers = #tpu.dot_dimension_numbers<[1], [0], [0], [1], [0, 0, 1, 1], [], []>} : vector<8x16xf32>, vector<16x128xf32>, vector<8x128xf32> -> vector<8x128xf32>
    %c0_31 = arith.constant 0 : index
    %c0_32 = arith.constant 0 : index
    %183 = vector.load %arg6[%c0_31, %c0_32] : memref<16x128xf32, #tpu.memory_space<vmem>>, vector<16x128xf32>
    %cst_33 = arith.constant dense<0.000000e+00> : vector<8x128xf32>
    %184 = tpu.matmul %180, %183, %cst_33 {dimension_numbers = #tpu.dot_dimension_numbers<[1], [0], [0], [1], [0, 0, 1, 1], [], []>} : vector<8x16xf32>, vector<16x128xf32>, vector<8x128xf32> -> vector<8x128xf32>
    %185 = arith.addf %182, %184 : vector<8x128xf32>
    %c0_34 = arith.constant 0 : index
    %c0_35 = arith.constant 0 : index
    %186 = vector.load %arg7[%c0_34, %c0_35] : memref<1x128xf32, #tpu.memory_space<vmem>>, vector<1x128xf32>
    %187 = vector.broadcast %186 : vector<1x128xf32> to vector<8x128xf32>
    %188 = arith.addf %185, %187 : vector<8x128xf32>
    %cst_36 = arith.constant dense<0xFF800000> : vector<8xf32>
    %189 = vector.multi_reduction <maximumf>, %188, %cst_36 [1] : vector<8x128xf32> to vector<8xf32>
    %190 = vector.shape_cast %189 : vector<8xf32> to vector<8x1xf32>
    %191 = vector.broadcast %190 : vector<8x1xf32> to vector<8x128xf32>
    %192 = arith.subf %188, %191 : vector<8x128xf32>
    %193 = math.exp %192 : vector<8x128xf32>
    %cst_37 = arith.constant dense<0.000000e+00> : vector<8xf32>
    %194 = vector.multi_reduction <add>, %193, %cst_37 [1] : vector<8x128xf32> to vector<8xf32>
    %195 = vector.shape_cast %194 : vector<8xf32> to vector<8x1xf32>
    %196 = math.log %195 : vector<8x1xf32>
    %197 = vector.broadcast %196 : vector<8x1xf32> to vector<8x128xf32>
    %198 = arith.subf %192, %197 : vector<8x128xf32>
    %c0_38 = arith.constant 0 : index
    %c0_39 = arith.constant 0 : index
    %199 = vector.load %arg8[%c0_38, %c0_39] : memref<8x128xf32, #tpu.memory_space<vmem>>, vector<8x128xf32>
    tpu.vector_store %arg8[%c0_38, %c0_39], %198 {strides = array<i32>} : memref<8x128xf32, #tpu.memory_space<vmem>>, vector<8x128xf32>,
    return
  }
  func.func @transform_0(%arg0: i32) -> (i32, i32, i32) {
    %c0_i32 = arith.constant 0 : i32
    %c0_i32_0 = arith.constant 0 : i32
    %c0_i32_1 = arith.constant 0 : i32
    return %arg0, %c0_i32, %c0_i32_0 : i32, i32, i32
  }
  func.func @transform_1(%arg0: i32) -> (i32, i32) {
    %c0_i32 = arith.constant 0 : i32
    %c0_i32_0 = arith.constant 0 : i32
    %c0_i32_1 = arith.constant 0 : i32
    return %c0_i32, %c0_i32_0 : i32, i32
  }
  func.func @transform_2(%arg0: i32) -> (i32, i32) {
    %c0_i32 = arith.constant 0 : i32
    %c0_i32_0 = arith.constant 0 : i32
    %c0_i32_1 = arith.constant 0 : i32
    return %c0_i32, %c0_i32_0 : i32, i32
  }
  func.func @transform_3(%arg0: i32) -> (i32, i32) {
    %c0_i32 = arith.constant 0 : i32
    %c0_i32_0 = arith.constant 0 : i32
    %c0_i32_1 = arith.constant 0 : i32
    return %c0_i32, %c0_i32_0 : i32, i32
  }
  func.func @transform_4(%arg0: i32) -> (i32, i32) {
    %c0_i32 = arith.constant 0 : i32
    %c0_i32_0 = arith.constant 0 : i32
    %c0_i32_1 = arith.constant 0 : i32
    return %c0_i32, %c0_i32_0 : i32, i32
  }
  func.func @transform_5(%arg0: i32) -> (i32, i32) {
    %c0_i32 = arith.constant 0 : i32
    %c0_i32_0 = arith.constant 0 : i32
    %c0_i32_1 = arith.constant 0 : i32
    return %c0_i32, %c0_i32_0 : i32, i32
  }
  func.func @transform_6(%arg0: i32) -> (i32, i32) {
    %c0_i32 = arith.constant 0 : i32
    %c0_i32_0 = arith.constant 0 : i32
    %c0_i32_1 = arith.constant 0 : i32
    return %c0_i32, %c0_i32_0 : i32, i32
  }
  func.func @transform_7(%arg0: i32) -> (i32, i32) {
    %c0_i32 = arith.constant 0 : i32
    %c0_i32_0 = arith.constant 0 : i32
    return %arg0, %c0_i32 : i32, i32
  }
}

</mosaic_0001>

<llo_original>
// kernel: tpu_custom_call.1
$region0: #{tpu_custom_call.1}
  #allocation0 [shape = 'u32[]', space=smem, size = 0x4, offset = 0x4, fixed_abs, tag = 'smem constant byte address 0x4 - core index']
  #allocation1 [shape = 'u32[144,128]{1,0:T(1,128)}', space=vmem, size = 0x12000, scoped, tag = 'internal scratch']
  %s0 = inlined_call_operand.vmem [shape: bf16[1,64,16], index: 0, kind: input, shape index: {}]
  %s1 = inlined_call_operand.hbm [shape: bf16[16,128], index: 1, kind: input, shape index: {}]
  %s2 = inlined_call_operand.vmem [shape: f32[1,128], index: 2, kind: input, shape index: {}]
  %s3 = inlined_call_operand.vmem [shape: f32[16,64], index: 3, kind: input, shape index: {}]
  %s4 = inlined_call_operand.vmem [shape: f32[16,128], index: 4, kind: input, shape index: {}]
  %s5 = inlined_call_operand.vmem [shape: f32[16,128], index: 5, kind: input, shape index: {}]
  %s6 = inlined_call_operand.vmem [shape: f32[1,128], index: 6, kind: input, shape index: {}]
  %s7 = inlined_call_operand.hbm [shape: f32[8,128], index: 7, kind: output, shape index: {}]
  %s8 = sld [smem:[#allocation0]]
  $region42: #{tpu_custom_call.1} parent=0
    _
  %s10 = ssub.s32 1, %s8
  %s11 = scalar_select 0, %s10, %s8
  $region1: #{tpu_custom_call.1} parent=0
    #allocation2 [shape = 'u8[4096]{0}', space=vmem, size = 0x1000, scoped, tag = 'input window, operand 1, single buffered']
    #allocation3 [shape = 's32[1]{0}', space=sflag, size = 0x4, scoped, tag = 'scoped memory for tpu_custom_call.1']
    #allocation4 [shape = 's32[1]{0}', space=sflag, size = 0x4, scoped, tag = 'scoped memory for tpu_custom_call.1']
    #allocation5 [shape = 'u8[4096]{0}', space=vmem, size = 0x1000, scoped, tag = 'output window, operand 0, single buffered']
    %12 = vsyncpa [#allocation3], 0
    %13 = vsyncpa [#allocation4], 0
    // Predicated region
    $region2: #{tpu_custom_call.1} parent=1 // pred_check
      _
    $region3: #{tpu_custom_call.1} parent=1 // pred_check_branch
      %15 = sbr.rel (0) target = $region5
    $region4: #{tpu_custom_call.1} parent=1 // pred_region
      _
    $region5: #{tpu_custom_call.1} parent=1 // pred_fallthru
      _
    // Predicated region
    $region6: #{tpu_custom_call.1} parent=1 // pred_check
      _
    $region7: #{tpu_custom_call.1} parent=1 // pred_check_branch
      %17 = sbr.rel (0) target = $region9
    $region8: #{tpu_custom_call.1} parent=1 // pred_region
      %s19 = ssub.s32 128, 128
      %20 = vsyncadd [#allocation3], %s19
      %s21 = sshll.u32 [#allocation2], 4
      %s22 = int_to_ptr.vmem [resolvable:$true] %s21
      %27 = dma.hbm_to_vmem [thread:$0]  %s1, 128, %s22, [#allocation3], 64, 64, 4
    $region9: #{tpu_custom_call.1} parent=1 // pred_fallthru
      _
    // Predicated region
    $region10: #{tpu_custom_call.1} parent=1 // pred_check
      _
    $region11: #{tpu_custom_call.1} parent=1 // pred_check_branch
      %29 = sbr.rel (0) target = $region13
    $region12: #{tpu_custom_call.1} parent=1 // pred_region
      _
    $region13: #{tpu_custom_call.1} parent=1 // pred_fallthru
      _
    // Predicated region
    $region14: #{tpu_custom_call.1} parent=1 // pred_check
      _
    $region15: #{tpu_custom_call.1} parent=1 // pred_check_branch
      %31 = sbr.rel (0) target = $region17
    $region16: #{tpu_custom_call.1} parent=1 // pred_region
      _
    $region17: #{tpu_custom_call.1} parent=1 // pred_fallthru
      _
    // Predicated region
    $region18: #{tpu_custom_call.1} parent=1 // pred_check
      _
    $region19: #{tpu_custom_call.1} parent=1 // pred_check_branch
      %33 = sbr.rel (0) target = $region21
    $region20: #{tpu_custom_call.1} parent=1 // pred_region
      _
    $region21: #{tpu_custom_call.1} parent=1 // pred_fallthru
      _
    // Predicated region
    $region22: #{tpu_custom_call.1} parent=1 // pred_check
      _
    $region23: #{tpu_custom_call.1} parent=1 // pred_check_branch
      %35 = sbr.rel (0) target = $region25
    $region24: #{tpu_custom_call.1} parent=1 // pred_region
      _
    $region25: #{tpu_custom_call.1} parent=1 // pred_fallthru
      _
    // Predicated region
    $region26: #{tpu_custom_call.1} parent=1 // pred_check
      _
    $region27: #{tpu_custom_call.1} parent=1 // pred_check_branch
      %37 = sbr.rel (0) target = $region29
    $region28: #{tpu_custom_call.1} parent=1 // pred_region
      _
    $region29: #{tpu_custom_call.1} parent=1 // pred_fallthru
      _
    // Predicated region
    $region30: #{tpu_custom_call.1} parent=1 // pred_check
      _
    $region31: #{tpu_custom_call.1} parent=1 // pred_check_branch
      %39 = sbr.rel (0) target = $region33
    $region32: #{tpu_custom_call.1} parent=1 // pred_region
      %40 = dma.done [#allocation3], 128
    $region33: #{tpu_custom_call.1} parent=1 // pred_fallthru
      _
    %v42 = vld [vmem:[%s0] sm:$0xf]
    %v43 = vld [vmem:[%s0 + $0x4] sm:$0xf]
    %v44 = vld [vmem:[%s0 + $0x8] sm:$0xf]
    %v45 = vld [vmem:[%s0 + $0xc] sm:$0xf]
    %v46 = vld [vmem:[%s0 + $0x10] sm:$0xf]
    %v47 = vld [vmem:[%s0 + $0x14] sm:$0xf]
    %v48 = vld [vmem:[%s0 + $0x18] sm:$0xf]
    %v49 = vld [vmem:[%s0 + $0x1c] sm:$0xf]
    %v50 = vld [vmem:[#allocation2] sm:$0xf]
    %v51 = vld [vmem:[#allocation2 + $0x4] sm:$0xf]
    %v52 = vld [vmem:[%s2] sm:$0x1]
    %v54 = vlaneseq
    %v55 = vshrl.u32 %v54, 7
    %v56 = vsub.s32 0, %v55
    %v57 = vrot.slane %v52, %v56
    %v67 = vunpack.c.l.b16 %v42
    %v68 = vunpack.c.l.b16 %v43
    %v69 = vunpack.c.l.b16 %v44
    %v70 = vunpack.c.l.b16 %v45
    %v71 = vunpack.c.l.b16 %v46
    %v72 = vunpack.c.l.b16 %v47
    %v73 = vunpack.c.l.b16 %v48
    %v74 = vunpack.c.l.b16 %v49
    %v75 = vpack.c.b16 %v68, %v67
    %v76 = vpack.c.b16 %v70, %v69
    %v77 = vpack.c.b16 %v72, %v71
    %v78 = vpack.c.b16 %v74, %v73
    %v81 = vunpack.c.l.b16 %v50
    %v82 = vunpack.c.l.b16 %v51
    %v83 = vpack.c.b16 %v82, %v81
    %vm85 = vcmask 130048
    %v87 = vsel %vm85, %v75, 0
    %v90 = vsel %vm85, %v76, 0
    %v93 = vsel %vm85, %v77, 0
    %v96 = vsel %vm85, %v78, 0
    %98 = vmatprep.subr.bf16.mxu0 0
    %99 = vmatpush1.bf16.msra.mxu0 0
    %100 = vmatprep.subr.bf16.mxu0 0
    %101 = vmatpush1.bf16.msra.mxu0 0
    %102 = vmatprep.subr.bf16.mxu0 0
    %103 = vmatpush1.bf16.msra.mxu0 0
    %104 = vmatprep.subr.bf16.mxu0 0
    %105 = vmatpush1.bf16.msra.mxu0 0
    %106 = vmatprep.subr.bf16.mxu0 0
    %107 = vmatpush1.bf16.msra.mxu0 0
    %108 = vmatprep.subr.bf16.mxu0 0
    %109 = vmatpush1.bf16.msra.mxu0 0
    %110 = vmatprep.subr.bf16.mxu0 0
    %111 = vmatpush1.bf16.msra.mxu0 0
    %112 = vmatprep.subr.bf16.mxu0 0
    %113 = vmatpush1.bf16.msra.mxu0 %v83
    %114 = vmatprep.subr.bf16.mxu0 0
    %115 = vmatpush2.bf16.msra.mxu0 0
    %116 = vmatprep.subr.bf16.mxu0 0
    %117 = vmatpush2.bf16.msra.mxu0 0
    %118 = vmatprep.subr.bf16.mxu0 0
    %119 = vmatpush2.bf16.msra.mxu0 0
    %120 = vmatprep.subr.bf16.mxu0 0
    %121 = vmatpush2.bf16.msra.mxu0 0
    %122 = vmatprep.subr.bf16.mxu0 0
    %123 = vmatpush2.bf16.msra.mxu0 0
    %124 = vmatprep.subr.bf16.mxu0 0
    %125 = vmatpush2.bf16.msra.mxu0 0
    %126 = vmatprep.subr.bf16.mxu0 0
    %127 = vmatpush2.bf16.msra.mxu0 0
    %128 = vmatprep.subr.bf16.mxu0 0
    %129 = vmatpush2.bf16.msra.mxu0 0
    %130 = vmatprep.mubr.bf16.mxu0 0
    %131 = vmatmul.mubr.bf16.gmra.mxu0 %v87
    %v132 = vpop.f32.mrf.mxu0
    %v133 = vadd.f32 %v57, %v132
    %v134 = vpop.f32.mrf.mxu0
    %v135 = vpop.f32.mrf.mxu0
    %v136 = vadd.f32 %v57, %v135
    %v137 = vpop.f32.mrf.mxu0
    %138 = vmatprep.mubr.bf16.mxu0 0
    %139 = vmatmul.mubr.bf16.gmra.mxu0 %v90
    %v140 = vpop.f32.mrf.mxu0
    %v141 = vadd.f32 %v57, %v140
    %v142 = vpop.f32.mrf.mxu0
    %v143 = vpop.f32.mrf.mxu0
    %v144 = vadd.f32 %v57, %v143
    %v145 = vpop.f32.mrf.mxu0
    %146 = vmatprep.mubr.bf16.mxu0 0
    %147 = vmatmul.mubr.bf16.gmra.mxu0 %v93
    %v148 = vpop.f32.mrf.mxu0
    %v149 = vadd.f32 %v57, %v148
    %v150 = vpop.f32.mrf.mxu0
    %v151 = vpop.f32.mrf.mxu0
    %v152 = vadd.f32 %v57, %v151
    %v153 = vpop.f32.mrf.mxu0
    %154 = vmatprep.mubr.bf16.mxu0 0
    %155 = vmatmul.mubr.bf16.gmra.mxu0 %v96
    %v156 = vpop.f32.mrf.mxu0
    %v157 = vadd.f32 %v57, %v156
    %v158 = vpop.f32.mrf.mxu0
    %v159 = vpop.f32.mrf.mxu0
    %v160 = vadd.f32 %v57, %v159
    %v161 = vpop.f32.mrf.mxu0
    %162 = vdwg.mxu0
    %v163 = vld [vmem:[%s3] sm:$0xff]
    %v164 = vld [vmem:[%s3 + $0x8] sm:$0xff]
    %v166 = vsel %vm85, 0.0, 0
    %168 = vmatprep.subr.mxu0 0.0
    %169 = vmatpush1.msra.mxu0 0.0
    %170 = vmatprep.subr.mxu0 0.0
    %171 = vmatpush1.msra.mxu0 0.0
    %172 = vmatprep.subr.mxu0 0.0
    %173 = vmatpush1.msra.mxu0 0.0
    %174 = vmatprep.subr.mxu0 0.0
    %175 = vmatpush1.msra.mxu0 0.0
    %176 = vmatprep.subr.mxu0 0.0
    %177 = vmatpush1.msra.mxu0 0.0
    %178 = vmatprep.subr.mxu0 0.0
    %179 = vmatpush1.msra.mxu0 0.0
    %180 = vmatprep.subr.mxu0 0.0
    %181 = vmatpush1.msra.mxu0 0.0
    %182 = vmatprep.subr.mxu0 0.0
    %183 = vmatpush1.msra.mxu0 0.0
    %184 = vmatprep.subr.mxu0 0.0
    %185 = vmatpush1.msra.mxu0 0.0
    %186 = vmatprep.subr.mxu0 0.0
    %187 = vmatpush1.msra.mxu0 0.0
    %188 = vmatprep.subr.mxu0 0.0
    %189 = vmatpush1.msra.mxu0 0.0
    %190 = vmatprep.subr.mxu0 0.0
    %191 = vmatpush1.msra.mxu0 0.0
    %192 = vmatprep.subr.mxu0 0.0
    %193 = vmatpush1.msra.mxu0 0.0
    %194 = vmatprep.subr.mxu0 0.0
    %195 = vmatpush1.msra.mxu0 0.0
    %196 = vmatprep.subr.mxu0 0.0
    %197 = vmatpush1.msra.mxu0 %v164
    %198 = vmatprep.subr.mxu0 0.0
    %199 = vmatpush1.msra.mxu0 %v163
    %200 = vmatprep.subr.mxu0 0.0
    %201 = vmatpush2.msra.mxu0 0.0
    %202 = vmatprep.subr.mxu0 0.0
    %203 = vmatpush2.msra.mxu0 0.0
    %204 = vmatprep.subr.mxu0 0.0
    %205 = vmatpush2.msra.mxu0 0.0
    %206 = vmatprep.subr.mxu0 0.0
    %207 = vmatpush2.msra.mxu0 0.0
    %208 = vmatprep.subr.mxu0 0.0
    %209 = vmatpush2.msra.mxu0 0.0
    %210 = vmatprep.subr.mxu0 0.0
    %211 = vmatpush2.msra.mxu0 0.0
    %212 = vmatprep.subr.mxu0 0.0
    %213 = vmatpush2.msra.mxu0 0.0
    %214 = vmatprep.subr.mxu0 0.0
    %215 = vmatpush2.msra.mxu0 0.0
    %216 = vmatprep.subr.mxu0 0.0
    %217 = vmatpush2.msra.mxu0 0.0
    %218 = vmatprep.subr.mxu0 0.0
    %219 = vmatpush2.msra.mxu0 0.0
    %220 = vmatprep.subr.mxu0 0.0
    %221 = vmatpush2.msra.mxu0 0.0
    %222 = vmatprep.subr.mxu0 0.0
    %223 = vmatpush2.msra.mxu0 0.0
    %224 = vmatprep.subr.mxu0 0.0
    %225 = vmatpush2.msra.mxu0 0.0
    %226 = vmatprep.subr.mxu0 0.0
    %227 = vmatpush2.msra.mxu0 0.0
    %228 = vmatprep.subr.mxu0 0.0
    %229 = vmatpush2.msra.mxu0 0.0
    %230 = vmatprep.subr.mxu0 0.0
    %231 = vmatpush2.msra.mxu0 0.0
    %232 = vmatprep.mubr.f32.mxu0 0.0
    %233 = vmatmul.mubr.f32.gmra.mxu0 %v166
    %v234 = vpop.f32.mrf.mxu0
    %v235 = vadd.f32 0.0, %v234
    %v236 = vpop.f32.mrf.mxu0
    %237 = vdwg.mxu0
    %v238 = vadd.f32 %v133, %v235
    %v239 = vxor.u32 %v238, 2147483648
    %v240 = vmul.f32 %v239, 1.442695
    %v241 = vpow.pop %v240
    %v242 = vadd.f32 %v241, 1.0
    %v243 = vrcp.pop %v242
    %v244 = vmul.f32 1.0, %v243
    %v245 = vtanh.pop %v238
    %v246 = vmul.f32 %v244, 0.0
    %248 = vrot.lane.b32.xlu0 %v245, 80
    %v249 = vpop.permute.xlu0 %248
    %v251 = vmul.f32 %v244, %v249
    %253 = vrot.lane.b32.xlu0 %v251, 16
    %v254 = vpop.permute.xlu0 %253
    %v256 = vadd.f32 %v246, %v254
    %v257 = vtanh.pop %v256
    %259 = vrot.lane.b32.xlu0 %v257, 16
    %v260 = vpop.permute.xlu0 %259
    %v262 = vmul.f32 %v244, %v260
    %264 = vrot.lane.b32.xlu0 %v262, 96
    %v265 = vpop.permute.xlu0 %264
    %v266 = vsel %vm85, %v265, 0
    %268 = vmatprep.subr.mxu0 0.0
    %269 = vmatpush1.msra.mxu0 0.0
    %270 = vmatprep.subr.mxu0 0.0
    %271 = vmatpush1.msra.mxu0 0.0
    %272 = vmatprep.subr.mxu0 0.0
    %273 = vmatpush1.msra.mxu0 0.0
    %274 = vmatprep.subr.mxu0 0.0
    %275 = vmatpush1.msra.mxu0 0.0
    %276 = vmatprep.subr.mxu0 0.0
    %277 = vmatpush1.msra.mxu0 0.0
    %278 = vmatprep.subr.mxu0 0.0
    %279 = vmatpush1.msra.mxu0 0.0
    %280 = vmatprep.subr.mxu0 0.0
    %281 = vmatpush1.msra.mxu0 0.0
    %282 = vmatprep.subr.mxu0 0.0
    %283 = vmatpush1.msra.mxu0 0.0
    %284 = vmatprep.subr.mxu0 0.0
    %285 = vmatpush1.msra.mxu0 0.0
    %286 = vmatprep.subr.mxu0 0.0
    %287 = vmatpush1.msra.mxu0 0.0
    %288 = vmatprep.subr.mxu0 0.0
    %289 = vmatpush1.msra.mxu0 0.0
    %290 = vmatprep.subr.mxu0 0.0
    %291 = vmatpush1.msra.mxu0 0.0
    %292 = vmatprep.subr.mxu0 0.0
    %293 = vmatpush1.msra.mxu0 0.0
    %294 = vmatprep.subr.mxu0 0.0
    %295 = vmatpush1.msra.mxu0 0.0
    %296 = vmatprep.subr.mxu0 0.0
    %297 = vmatpush1.msra.mxu0 %v164
    %298 = vmatprep.subr.mxu0 0.0
    %299 = vmatpush1.msra.mxu0 %v163
    %300 = vmatprep.subr.mxu0 0.0
    %301 = vmatpush2.msra.mxu0 0.0
    %302 = vmatprep.subr.mxu0 0.0
    %303 = vmatpush2.msra.mxu0 0.0
    %304 = vmatprep.subr.mxu0 0.0
    %305 = vmatpush2.msra.mxu0 0.0
    %306 = vmatprep.subr.mxu0 0.0
    %307 = vmatpush2.msra.mxu0 0.0
    %308 = vmatprep.subr.mxu0 0.0
    %309 = vmatpush2.msra.mxu0 0.0
    %310 = vmatprep.subr.mxu0 0.0
    %311 = vmatpush2.msra.mxu0 0.0
    %312 = vmatprep.subr.mxu0 0.0
    %313 = vmatpush2.msra.mxu0 0.0
    %314 = vmatprep.subr.mxu0 0.0
    %315 = vmatpush2.msra.mxu0 0.0
    %316 = vmatprep.subr.mxu0 0.0
    %317 = vmatpush2.msra.mxu0 0.0
    %318 = vmatprep.subr.mxu0 0.0
    %319 = vmatpush2.msra.mxu0 0.0
    %320 = vmatprep.subr.mxu0 0.0
    %321 = vmatpush2.msra.mxu0 0.0
    %322 = vmatprep.subr.mxu0 0.0
    %323 = vmatpush2.msra.mxu0 0.0
    %324 = vmatprep.subr.mxu0 0.0
    %325 = vmatpush2.msra.mxu0 0.0
    %326 = vmatprep.subr.mxu0 0.0
    %327 = vmatpush2.msra.mxu0 0.0
    %328 = vmatprep.subr.mxu0 0.0
    %329 = vmatpush2.msra.mxu0 0.0
    %330 = vmatprep.subr.mxu0 0.0
    %331 = vmatpush2.msra.mxu0 0.0
    %332 = vmatprep.mubr.f32.mxu0 0.0
    %333 = vmatmul.mubr.f32.gmra.mxu0 %v266
    %v334 = vpop.f32.mrf.mxu0
    %v335 = vadd.f32 0.0, %v334
    %v336 = vpop.f32.mrf.mxu0
    %337 = vdwg.mxu0
    %v338 = vadd.f32 %v136, %v335
    %v339 = vxor.u32 %v338, 2147483648
    %v340 = vmul.f32 %v339, 1.442695
    %v341 = vpow.pop %v340
    %v342 = vadd.f32 %v341, 1.0
    %v343 = vrcp.pop %v342
    %v344 = vmul.f32 1.0, %v343
    %v345 = vtanh.pop %v338
    %v346 = vmul.f32 %v344, %v256
    %348 = vrot.lane.b32.xlu0 %v345, 80
    %v349 = vpop.permute.xlu0 %348
    %v351 = vmul.f32 %v344, %v349
    %353 = vrot.lane.b32.xlu0 %v351, 16
    %v354 = vpop.permute.xlu0 %353
    %v356 = vadd.f32 %v346, %v354
    %v357 = vtanh.pop %v356
    %359 = vrot.lane.b32.xlu0 %v357, 16
    %v360 = vpop.permute.xlu0 %359
    %v362 = vmul.f32 %v344, %v360
    %364 = vrot.lane.b32.xlu0 %v362, 96
    %v365 = vpop.permute.xlu0 %364
    %v366 = vsel %vm85, %v365, 0
    %368 = vmatprep.subr.mxu0 0.0
    %369 = vmatpush1.msra.mxu0 0.0
    %370 = vmatprep.subr.mxu0 0.0
    %371 = vmatpush1.msra.mxu0 0.0
    %372 = vmatprep.subr.mxu0 0.0
    %373 = vmatpush1.msra.mxu0 0.0
    %374 = vmatprep.subr.mxu0 0.0
    %375 = vmatpush1.msra.mxu0 0.0
    %376 = vmatprep.subr.mxu0 0.0
    %377 = vmatpush1.msra.mxu0 0.0
    %378 = vmatprep.subr.mxu0 0.0
    %379 = vmatpush1.msra.mxu0 0.0
    %380 = vmatprep.subr.mxu0 0.0
    %381 = vmatpush1.msra.mxu0 0.0
    %382 = vmatprep.subr.mxu0 0.0
    %383 = vmatpush1.msra.mxu0 0.0
    %384 = vmatprep.subr.mxu0 0.0
    %385 = vmatpush1.msra.mxu0 0.0
    %386 = vmatprep.subr.mxu0 0.0
    %387 = vmatpush1.msra.mxu0 0.0
    %388 = vmatprep.subr.mxu0 0.0
    %389 = vmatpush1.msra.mxu0 0.0
    %390 = vmatprep.subr.mxu0 0.0
    %391 = vmatpush1.msra.mxu0 0.0
    %392 = vmatprep.subr.mxu0 0.0
    %393 = vmatpush1.msra.mxu0 0.0
    %394 = vmatprep.subr.mxu0 0.0
    %395 = vmatpush1.msra.mxu0 0.0
    %396 = vmatprep.subr.mxu0 0.0
    %397 = vmatpush1.msra.mxu0 %v164
    %398 = vmatprep.subr.mxu0 0.0
    %399 = vmatpush1.msra.mxu0 %v163
    %400 = vmatprep.subr.mxu0 0.0
    %401 = vmatpush2.msra.mxu0 0.0
    %402 = vmatprep.subr.mxu0 0.0
    %403 = vmatpush2.msra.mxu0 0.0
    %404 = vmatprep.subr.mxu0 0.0
    %405 = vmatpush2.msra.mxu0 0.0
    %406 = vmatprep.subr.mxu0 0.0
    %407 = vmatpush2.msra.mxu0 0.0
    %408 = vmatprep.subr.mxu0 0.0
    %409 = vmatpush2.msra.mxu0 0.0
    %410 = vmatprep.subr.mxu0 0.0
    %411 = vmatpush2.msra.mxu0 0.0
    %412 = vmatprep.subr.mxu0 0.0
    %413 = vmatpush2.msra.mxu0 0.0
    %414 = vmatprep.subr.mxu0 0.0
    %415 = vmatpush2.msra.mxu0 0.0
    %416 = vmatprep.subr.mxu0 0.0
    %417 = vmatpush2.msra.mxu0 0.0
    %418 = vmatprep.subr.mxu0 0.0
    %419 = vmatpush2.msra.mxu0 0.0
    %420 = vmatprep.subr.mxu0 0.0
    %421 = vmatpush2.msra.mxu0 0.0
    %422 = vmatprep.subr.mxu0 0.0
    %423 = vmatpush2.msra.mxu0 0.0
    %424 = vmatprep.subr.mxu0 0.0
    %425 = vmatpush2.msra.mxu0 0.0
    %426 = vmatprep.subr.mxu0 0.0
    %427 = vmatpush2.msra.mxu0 0.0
    %428 = vmatprep.subr.mxu0 0.0
    %429 = vmatpush2.msra.mxu0 0.0
    %430 = vmatprep.subr.mxu0 0.0
    %431 = vmatpush2.msra.mxu0 0.0
    %432 = vmatprep.mubr.f32.mxu0 0.0
    %433 = vmatmul.mubr.f32.gmra.mxu0 %v366
    %v434 = vpop.f32.mrf.mxu0
    %v435 = vadd.f32 0.0, %v434
    %v436 = vpop.f32.mrf.mxu0
    %437 = vdwg.mxu0
    %v438 = vadd.f32 %v141, %v435
    %v439 = vxor.u32 %v438, 2147483648
    %v440 = vmul.f32 %v439, 1.442695
    %v441 = vpow.pop %v440
    %v442 = vadd.f32 %v441, 1.0
    %v443 = vrcp.pop %v442
    %v444 = vmul.f32 1.0, %v443
    %v445 = vtanh.pop %v438
    %v446 = vmul.f32 %v444, %v356
    %448 = vrot.lane.b32.xlu0 %v445, 80
    %v449 = vpop.permute.xlu0 %448
    %v451 = vmul.f32 %v444, %v449
    %453 = vrot.lane.b32.xlu0 %v451, 16
    %v454 = vpop.permute.xlu0 %453
    %v456 = vadd.f32 %v446, %v454
    %v457 = vtanh.pop %v456
    %459 = vrot.lane.b32.xlu0 %v457, 16
    %v460 = vpop.permute.xlu0 %459
    %v462 = vmul.f32 %v444, %v460
    %464 = vrot.lane.b32.xlu0 %v462, 96
    %v465 = vpop.permute.xlu0 %464
    %v466 = vsel %vm85, %v465, 0
    %468 = vmatprep.subr.mxu0 0.0
    %469 = vmatpush1.msra.mxu0 0.0
    %470 = vmatprep.subr.mxu0 0.0
    %471 = vmatpush1.msra.mxu0 0.0
    %472 = vmatprep.subr.mxu0 0.0
    %473 = vmatpush1.msra.mxu0 0.0
    %474 = vmatprep.subr.mxu0 0.0
    %475 = vmatpush1.msra.mxu0 0.0
    %476 = vmatprep.subr.mxu0 0.0
    %477 = vmatpush1.msra.mxu0 0.0
    %478 = vmatprep.subr.mxu0 0.0
    %479 = vmatpush1.msra.mxu0 0.0
    %480 = vmatprep.subr.mxu0 0.0
    %481 = vmatpush1.msra.mxu0 0.0
    %482 = vmatprep.subr.mxu0 0.0
    %483 = vmatpush1.msra.mxu0 0.0
    %484 = vmatprep.subr.mxu0 0.0
    %485 = vmatpush1.msra.mxu0 0.0
    %486 = vmatprep.subr.mxu0 0.0
    %487 = vmatpush1.msra.mxu0 0.0
    %488 = vmatprep.subr.mxu0 0.0
    %489 = vmatpush1.msra.mxu0 0.0
    %490 = vmatprep.subr.mxu0 0.0
    %491 = vmatpush1.msra.mxu0 0.0
    %492 = vmatprep.subr.mxu0 0.0
    %493 = vmatpush1.msra.mxu0 0.0
    %494 = vmatprep.subr.mxu0 0.0
    %495 = vmatpush1.msra.mxu0 0.0
    %496 = vmatprep.subr.mxu0 0.0
    %497 = vmatpush1.msra.mxu0 %v164
    %498 = vmatprep.subr.mxu0 0.0
    %499 = vmatpush1.msra.mxu0 %v163
    %500 = vmatprep.subr.mxu0 0.0
    %501 = vmatpush2.msra.mxu0 0.0
    %502 = vmatprep.subr.mxu0 0.0
    %503 = vmatpush2.msra.mxu0 0.0
    %504 = vmatprep.subr.mxu0 0.0
    %505 = vmatpush2.msra.mxu0 0.0
    %506 = vmatprep.subr.mxu0 0.0
    %507 = vmatpush2.msra.mxu0 0.0
    %508 = vmatprep.subr.mxu0 0.0
    %509 = vmatpush2.msra.mxu0 0.0
    %510 = vmatprep.subr.mxu0 0.0
    %511 = vmatpush2.msra.mxu0 0.0
    %512 = vmatprep.subr.mxu0 0.0
    %513 = vmatpush2.msra.mxu0 0.0
    %514 = vmatprep.subr.mxu0 0.0
    %515 = vmatpush2.msra.mxu0 0.0
    %516 = vmatprep.subr.mxu0 0.0
    %517 = vmatpush2.msra.mxu0 0.0
    %518 = vmatprep.subr.mxu0 0.0
    %519 = vmatpush2.msra.mxu0 0.0
    %520 = vmatprep.subr.mxu0 0.0
    %521 = vmatpush2.msra.mxu0 0.0
    %522 = vmatprep.subr.mxu0 0.0
    %523 = vmatpush2.msra.mxu0 0.0
    %524 = vmatprep.subr.mxu0 0.0
    %525 = vmatpush2.msra.mxu0 0.0
    %526 = vmatprep.subr.mxu0 0.0
    %527 = vmatpush2.msra.mxu0 0.0
    %528 = vmatprep.subr.mxu0 0.0
    %529 = vmatpush2.msra.mxu0 0.0
    %530 = vmatprep.subr.mxu0 0.0
    %531 = vmatpush2.msra.mxu0 0.0
    %532 = vmatprep.mubr.f32.mxu0 0.0
    %533 = vmatmul.mubr.f32.gmra.mxu0 %v466
    %v534 = vpop.f32.mrf.mxu0
    %v535 = vadd.f32 0.0, %v534
    %v536 = vpop.f32.mrf.mxu0
    %537 = vdwg.mxu0
    %v538 = vadd.f32 %v144, %v535
    %v539 = vxor.u32 %v538, 2147483648
    %v540 = vmul.f32 %v539, 1.442695
    %v541 = vpow.pop %v540
    %v542 = vadd.f32 %v541, 1.0
    %v543 = vrcp.pop %v542
    %v544 = vmul.f32 1.0, %v543
    %v545 = vtanh.pop %v538
    %v546 = vmul.f32 %v544, %v456
    %548 = vrot.lane.b32.xlu0 %v545, 80
    %v549 = vpop.permute.xlu0 %548
    %v551 = vmul.f32 %v544, %v549
    %553 = vrot.lane.b32.xlu0 %v551, 16
    %v554 = vpop.permute.xlu0 %553
    %v556 = vadd.f32 %v546, %v554
    %v557 = vtanh.pop %v556
    %559 = vrot.lane.b32.xlu0 %v557, 16
    %v560 = vpop.permute.xlu0 %559
    %v562 = vmul.f32 %v544, %v560
    %564 = vrot.lane.b32.xlu0 %v562, 96
    %v565 = vpop.permute.xlu0 %564
    %v566 = vsel %vm85, %v565, 0
    %568 = vmatprep.subr.mxu0 0.0
    %569 = vmatpush1.msra.mxu0 0.0
    %570 = vmatprep.subr.mxu0 0.0
    %571 = vmatpush1.msra.mxu0 0.0
    %572 = vmatprep.subr.mxu0 0.0
    %573 = vmatpush1.msra.mxu0 0.0
    %574 = vmatprep.subr.mxu0 0.0
    %575 = vmatpush1.msra.mxu0 0.0
    %576 = vmatprep.subr.mxu0 0.0
    %577 = vmatpush1.msra.mxu0 0.0
    %578 = vmatprep.subr.mxu0 0.0
    %579 = vmatpush1.msra.mxu0 0.0
    %580 = vmatprep.subr.mxu0 0.0
    %581 = vmatpush1.msra.mxu0 0.0
    %582 = vmatprep.subr.mxu0 0.0
    %583 = vmatpush1.msra.mxu0 0.0
    %584 = vmatprep.subr.mxu0 0.0
    %585 = vmatpush1.msra.mxu0 0.0
    %586 = vmatprep.subr.mxu0 0.0
    %587 = vmatpush1.msra.mxu0 0.0
    %588 = vmatprep.subr.mxu0 0.0
    %589 = vmatpush1.msra.mxu0 0.0
    %590 = vmatprep.subr.mxu0 0.0
    %591 = vmatpush1.msra.mxu0 0.0
    %592 = vmatprep.subr.mxu0 0.0
    %593 = vmatpush1.msra.mxu0 0.0
    %594 = vmatprep.subr.mxu0 0.0
    %595 = vmatpush1.msra.mxu0 0.0
    %596 = vmatprep.subr.mxu0 0.0
    %597 = vmatpush1.msra.mxu0 %v164
    %598 = vmatprep.subr.mxu0 0.0
    %599 = vmatpush1.msra.mxu0 %v163
    %600 = vmatprep.subr.mxu0 0.0
    %601 = vmatpush2.msra.mxu0 0.0
    %602 = vmatprep.subr.mxu0 0.0
    %603 = vmatpush2.msra.mxu0 0.0
    %604 = vmatprep.subr.mxu0 0.0
    %605 = vmatpush2.msra.mxu0 0.0
    %606 = vmatprep.subr.mxu0 0.0
    %607 = vmatpush2.msra.mxu0 0.0
    %608 = vmatprep.subr.mxu0 0.0
    %609 = vmatpush2.msra.mxu0 0.0
    %610 = vmatprep.subr.mxu0 0.0
    %611 = vmatpush2.msra.mxu0 0.0
    %612 = vmatprep.subr.mxu0 0.0
    %613 = vmatpush2.msra.mxu0 0.0
    %614 = vmatprep.subr.mxu0 0.0
    %615 = vmatpush2.msra.mxu0 0.0
    %616 = vmatprep.subr.mxu0 0.0
    %617 = vmatpush2.msra.mxu0 0.0
    %618 = vmatprep.subr.mxu0 0.0
    %619 = vmatpush2.msra.mxu0 0.0
    %620 = vmatprep.subr.mxu0 0.0
    %621 = vmatpush2.msra.mxu0 0.0
    %622 = vmatprep.subr.mxu0 0.0
    %623 = vmatpush2.msra.mxu0 0.0
    %624 = vmatprep.subr.mxu0 0.0
    %625 = vmatpush2.msra.mxu0 0.0
    %626 = vmatprep.subr.mxu0 0.0
    %627 = vmatpush2.msra.mxu0 0.0
    %628 = vmatprep.subr.mxu0 0.0
    %629 = vmatpush2.msra.mxu0 0.0
    %630 = vmatprep.subr.mxu0 0.0
    %631 = vmatpush2.msra.mxu0 0.0
    %632 = vmatprep.mubr.f32.mxu0 0.0
    %633 = vmatmul.mubr.f32.gmra.mxu0 %v566
    %v634 = vpop.f32.mrf.mxu0
    %v635 = vadd.f32 0.0, %v634
    %v636 = vpop.f32.mrf.mxu0
    %637 = vdwg.mxu0
    %v638 = vadd.f32 %v149, %v635
    %v639 = vxor.u32 %v638, 2147483648
    %v640 = vmul.f32 %v639, 1.442695
    %v641 = vpow.pop %v640
    %v642 = vadd.f32 %v641, 1.0
    %v643 = vrcp.pop %v642
    %v644 = vmul.f32 1.0, %v643
    %v645 = vtanh.pop %v638
    %v646 = vmul.f32 %v644, %v556
    %648 = vrot.lane.b32.xlu0 %v645, 80
    %v649 = vpop.permute.xlu0 %648
    %v651 = vmul.f32 %v644, %v649
    %653 = vrot.lane.b32.xlu0 %v651, 16
    %v654 = vpop.permute.xlu0 %653
    %v656 = vadd.f32 %v646, %v654
    %v657 = vtanh.pop %v656
    %659 = vrot.lane.b32.xlu0 %v657, 16
    %v660 = vpop.permute.xlu0 %659
    %v662 = vmul.f32 %v644, %v660
    %664 = vrot.lane.b32.xlu0 %v662, 96
    %v665 = vpop.permute.xlu0 %664
    %v666 = vsel %vm85, %v665, 0
    %668 = vmatprep.subr.mxu0 0.0
    %669 = vmatpush1.msra.mxu0 0.0
    %670 = vmatprep.subr.mxu0 0.0
    %671 = vmatpush1.msra.mxu0 0.0
    %672 = vmatprep.subr.mxu0 0.0
    %673 = vmatpush1.msra.mxu0 0.0
    %674 = vmatprep.subr.mxu0 0.0
    %675 = vmatpush1.msra.mxu0 0.0
    %676 = vmatprep.subr.mxu0 0.0
    %677 = vmatpush1.msra.mxu0 0.0
    %678 = vmatprep.subr.mxu0 0.0
    %679 = vmatpush1.msra.mxu0 0.0
    %680 = vmatprep.subr.mxu0 0.0
    %681 = vmatpush1.msra.mxu0 0.0
    %682 = vmatprep.subr.mxu0 0.0
    %683 = vmatpush1.msra.mxu0 0.0
    %684 = vmatprep.subr.mxu0 0.0
    %685 = vmatpush1.msra.mxu0 0.0
    %686 = vmatprep.subr.mxu0 0.0
    %687 = vmatpush1.msra.mxu0 0.0
    %688 = vmatprep.subr.mxu0 0.0
    %689 = vmatpush1.msra.mxu0 0.0
    %690 = vmatprep.subr.mxu0 0.0
    %691 = vmatpush1.msra.mxu0 0.0
    %692 = vmatprep.subr.mxu0 0.0
    %693 = vmatpush1.msra.mxu0 0.0
    %694 = vmatprep.subr.mxu0 0.0
    %695 = vmatpush1.msra.mxu0 0.0
    %696 = vmatprep.subr.mxu0 0.0
    %697 = vmatpush1.msra.mxu0 %v164
    %698 = vmatprep.subr.mxu0 0.0
    %699 = vmatpush1.msra.mxu0 %v163
    %700 = vmatprep.subr.mxu0 0.0
    %701 = vmatpush2.msra.mxu0 0.0
    %702 = vmatprep.subr.mxu0 0.0
    %703 = vmatpush2.msra.mxu0 0.0
    %704 = vmatprep.subr.mxu0 0.0
    %705 = vmatpush2.msra.mxu0 0.0
    %706 = vmatprep.subr.mxu0 0.0
    %707 = vmatpush2.msra.mxu0 0.0
    %708 = vmatprep.subr.mxu0 0.0
    %709 = vmatpush2.msra.mxu0 0.0
    %710 = vmatprep.subr.mxu0 0.0
    %711 = vmatpush2.msra.mxu0 0.0
    %712 = vmatprep.subr.mxu0 0.0
    %713 = vmatpush2.msra.mxu0 0.0
    %714 = vmatprep.subr.mxu0 0.0
    %715 = vmatpush2.msra.mxu0 0.0
    %716 = vmatprep.subr.mxu0 0.0
    %717 = vmatpush2.msra.mxu0 0.0
    %718 = vmatprep.subr.mxu0 0.0
    %719 = vmatpush2.msra.mxu0 0.0
    %720 = vmatprep.subr.mxu0 0.0
    %721 = vmatpush2.msra.mxu0 0.0
    %722 = vmatprep.subr.mxu0 0.0
    %723 = vmatpush2.msra.mxu0 0.0
    %724 = vmatprep.subr.mxu0 0.0
    %725 = vmatpush2.msra.mxu0 0.0
    %726 = vmatprep.subr.mxu0 0.0
    %727 = vmatpush2.msra.mxu0 0.0
    %728 = vmatprep.subr.mxu0 0.0
    %729 = vmatpush2.msra.mxu0 0.0
    %730 = vmatprep.subr.mxu0 0.0
    %731 = vmatpush2.msra.mxu0 0.0
    %732 = vmatprep.mubr.f32.mxu0 0.0
    %733 = vmatmul.mubr.f32.gmra.mxu0 %v666
    %v734 = vpop.f32.mrf.mxu0
    %v735 = vadd.f32 0.0, %v734
    %v736 = vpop.f32.mrf.mxu0
    %737 = vdwg.mxu0
    %v738 = vadd.f32 %v152, %v735
    %v739 = vxor.u32 %v738, 2147483648
    %v740 = vmul.f32 %v739, 1.442695
    %v741 = vpow.pop %v740
    %v742 = vadd.f32 %v741, 1.0
    %v743 = vrcp.pop %v742
    %v744 = vmul.f32 1.0, %v743
    %v745 = vtanh.pop %v738
    %v746 = vmul.f32 %v744, %v656
    %748 = vrot.lane.b32.xlu0 %v745, 80
    %v749 = vpop.permute.xlu0 %748
    %v751 = vmul.f32 %v744, %v749
    %753 = vrot.lane.b32.xlu0 %v751, 16
    %v754 = vpop.permute.xlu0 %753
    %v756 = vadd.f32 %v746, %v754
    %v757 = vtanh.pop %v756
    %759 = vrot.lane.b32.xlu0 %v757, 16
    %v760 = vpop.permute.xlu0 %759
    %v762 = vmul.f32 %v744, %v760
    %764 = vrot.lane.b32.xlu0 %v762, 96
    %v765 = vpop.permute.xlu0 %764
    %v766 = vsel %vm85, %v765, 0
    %768 = vmatprep.subr.mxu0 0.0
    %769 = vmatpush1.msra.mxu0 0.0
    %770 = vmatprep.subr.mxu0 0.0
    %771 = vmatpush1.msra.mxu0 0.0
    %772 = vmatprep.subr.mxu0 0.0
    %773 = vmatpush1.msra.mxu0 0.0
    %774 = vmatprep.subr.mxu0 0.0
    %775 = vmatpush1.msra.mxu0 0.0
    %776 = vmatprep.subr.mxu0 0.0
    %777 = vmatpush1.msra.mxu0 0.0
    %778 = vmatprep.subr.mxu0 0.0
    %779 = vmatpush1.msra.mxu0 0.0
    %780 = vmatprep.subr.mxu0 0.0
    %781 = vmatpush1.msra.mxu0 0.0
    %782 = vmatprep.subr.mxu0 0.0
    %783 = vmatpush1.msra.mxu0 0.0
    %784 = vmatprep.subr.mxu0 0.0
    %785 = vmatpush1.msra.mxu0 0.0
    %786 = vmatprep.subr.mxu0 0.0
    %787 = vmatpush1.msra.mxu0 0.0
    %788 = vmatprep.subr.mxu0 0.0
    %789 = vmatpush1.msra.mxu0 0.0
    %790 = vmatprep.subr.mxu0 0.0
    %791 = vmatpush1.msra.mxu0 0.0
    %792 = vmatprep.subr.mxu0 0.0
    %793 = vmatpush1.msra.mxu0 0.0
    %794 = vmatprep.subr.mxu0 0.0
    %795 = vmatpush1.msra.mxu0 0.0
    %796 = vmatprep.subr.mxu0 0.0
    %797 = vmatpush1.msra.mxu0 %v164
    %798 = vmatprep.subr.mxu0 0.0
    %799 = vmatpush1.msra.mxu0 %v163
    %800 = vmatprep.subr.mxu0 0.0
    %801 = vmatpush2.msra.mxu0 0.0
    %802 = vmatprep.subr.mxu0 0.0
    %803 = vmatpush2.msra.mxu0 0.0
    %804 = vmatprep.subr.mxu0 0.0
    %805 = vmatpush2.msra.mxu0 0.0
    %806 = vmatprep.subr.mxu0 0.0
    %807 = vmatpush2.msra.mxu0 0.0
    %808 = vmatprep.subr.mxu0 0.0
    %809 = vmatpush2.msra.mxu0 0.0
    %810 = vmatprep.subr.mxu0 0.0
    %811 = vmatpush2.msra.mxu0 0.0
    %812 = vmatprep.subr.mxu0 0.0
    %813 = vmatpush2.msra.mxu0 0.0
    %814 = vmatprep.subr.mxu0 0.0
    %815 = vmatpush2.msra.mxu0 0.0
    %816 = vmatprep.subr.mxu0 0.0
    %817 = vmatpush2.msra.mxu0 0.0
    %818 = vmatprep.subr.mxu0 0.0
    %819 = vmatpush2.msra.mxu0 0.0
    %820 = vmatprep.subr.mxu0 0.0
    %821 = vmatpush2.msra.mxu0 0.0
    %822 = vmatprep.subr.mxu0 0.0
    %823 = vmatpush2.msra.mxu0 0.0
    %824 = vmatprep.subr.mxu0 0.0
    %825 = vmatpush2.msra.mxu0 0.0
    %826 = vmatprep.subr.mxu0 0.0
    %827 = vmatpush2.msra.mxu0 0.0
    %828 = vmatprep.subr.mxu0 0.0
    %829 = vmatpush2.msra.mxu0 0.0
    %830 = vmatprep.subr.mxu0 0.0
    %831 = vmatpush2.msra.mxu0 0.0
    %832 = vmatprep.mubr.f32.mxu0 0.0
    %833 = vmatmul.mubr.f32.gmra.mxu0 %v766
    %v834 = vpop.f32.mrf.mxu0
    %v835 = vadd.f32 0.0, %v834
    %v836 = vpop.f32.mrf.mxu0
    %837 = vdwg.mxu0
    %v838 = vadd.f32 %v157, %v835
    %v839 = vxor.u32 %v838, 2147483648
    %v840 = vmul.f32 %v839, 1.442695
    %v841 = vpow.pop %v840
    %v842 = vadd.f32 %v841, 1.0
    %v843 = vrcp.pop %v842
    %v844 = vmul.f32 1.0, %v843
    %v845 = vtanh.pop %v838
    %v846 = vmul.f32 %v844, %v756
    %848 = vrot.lane.b32.xlu0 %v845, 80
    %v849 = vpop.permute.xlu0 %848
    %v851 = vmul.f32 %v844, %v849
    %853 = vrot.lane.b32.xlu0 %v851, 16
    %v854 = vpop.permute.xlu0 %853
    %v856 = vadd.f32 %v846, %v854
    %v857 = vtanh.pop %v856
    %859 = vrot.lane.b32.xlu0 %v857, 16
    %v860 = vpop.permute.xlu0 %859
    %v862 = vmul.f32 %v844, %v860
    %864 = vrot.lane.b32.xlu0 %v862, 96
    %v865 = vpop.permute.xlu0 %864
    %v866 = vsel %vm85, %v865, 0
    %868 = vmatprep.subr.mxu0 0.0
    %869 = vmatpush1.msra.mxu0 0.0
    %870 = vmatprep.subr.mxu0 0.0
    %871 = vmatpush1.msra.mxu0 0.0
    %872 = vmatprep.subr.mxu0 0.0
    %873 = vmatpush1.msra.mxu0 0.0
    %874 = vmatprep.subr.mxu0 0.0
    %875 = vmatpush1.msra.mxu0 0.0
    %876 = vmatprep.subr.mxu0 0.0
    %877 = vmatpush1.msra.mxu0 0.0
    %878 = vmatprep.subr.mxu0 0.0
    %879 = vmatpush1.msra.mxu0 0.0
    %880 = vmatprep.subr.mxu0 0.0
    %881 = vmatpush1.msra.mxu0 0.0
    %882 = vmatprep.subr.mxu0 0.0
    %883 = vmatpush1.msra.mxu0 0.0
    %884 = vmatprep.subr.mxu0 0.0
    %885 = vmatpush1.msra.mxu0 0.0
    %886 = vmatprep.subr.mxu0 0.0
    %887 = vmatpush1.msra.mxu0 0.0
    %888 = vmatprep.subr.mxu0 0.0
    %889 = vmatpush1.msra.mxu0 0.0
    %890 = vmatprep.subr.mxu0 0.0
    %891 = vmatpush1.msra.mxu0 0.0
    %892 = vmatprep.subr.mxu0 0.0
    %893 = vmatpush1.msra.mxu0 0.0
    %894 = vmatprep.subr.mxu0 0.0
    %895 = vmatpush1.msra.mxu0 0.0
    %896 = vmatprep.subr.mxu0 0.0
    %897 = vmatpush1.msra.mxu0 %v164
    %898 = vmatprep.subr.mxu0 0.0
    %899 = vmatpush1.msra.mxu0 %v163
    %900 = vmatprep.subr.mxu0 0.0
    %901 = vmatpush2.msra.mxu0 0.0
    %902 = vmatprep.subr.mxu0 0.0
    %903 = vmatpush2.msra.mxu0 0.0
    %904 = vmatprep.subr.mxu0 0.0
    %905 = vmatpush2.msra.mxu0 0.0
    %906 = vmatprep.subr.mxu0 0.0
    %907 = vmatpush2.msra.mxu0 0.0
    %908 = vmatprep.subr.mxu0 0.0
    %909 = vmatpush2.msra.mxu0 0.0
    %910 = vmatprep.subr.mxu0 0.0
    %911 = vmatpush2.msra.mxu0 0.0
    %912 = vmatprep.subr.mxu0 0.0
    %913 = vmatpush2.msra.mxu0 0.0
    %914 = vmatprep.subr.mxu0 0.0
    %915 = vmatpush2.msra.mxu0 0.0
    %916 = vmatprep.subr.mxu0 0.0
    %917 = vmatpush2.msra.mxu0 0.0
    %918 = vmatprep.subr.mxu0 0.0
    %919 = vmatpush2.msra.mxu0 0.0
    %920 = vmatprep.subr.mxu0 0.0
    %921 = vmatpush2.msra.mxu0 0.0
    %922 = vmatprep.subr.mxu0 0.0
    %923 = vmatpush2.msra.mxu0 0.0
    %924 = vmatprep.subr.mxu0 0.0
    %925 = vmatpush2.msra.mxu0 0.0
    %926 = vmatprep.subr.mxu0 0.0
    %927 = vmatpush2.msra.mxu0 0.0
    %928 = vmatprep.subr.mxu0 0.0
    %929 = vmatpush2.msra.mxu0 0.0
    %930 = vmatprep.subr.mxu0 0.0
    %931 = vmatpush2.msra.mxu0 0.0
    %932 = vmatprep.mubr.f32.mxu0 0.0
    %933 = vmatmul.mubr.f32.gmra.mxu0 %v866
    %v934 = vpop.f32.mrf.mxu0
    %v935 = vadd.f32 0.0, %v934
    %v936 = vpop.f32.mrf.mxu0
    %937 = vdwg.mxu0
    %v938 = vadd.f32 %v160, %v935
    %v939 = vxor.u32 %v938, 2147483648
    %v940 = vmul.f32 %v939, 1.442695
    %v941 = vpow.pop %v940
    %v942 = vadd.f32 %v941, 1.0
    %v943 = vrcp.pop %v942
    %v944 = vmul.f32 1.0, %v943
    %v945 = vtanh.pop %v938
    %v946 = vmul.f32 %v944, %v856
    %948 = vrot.lane.b32.xlu0 %v945, 80
    %v949 = vpop.permute.xlu0 %948
    %v951 = vmul.f32 %v944, %v949
    %953 = vrot.lane.b32.xlu0 %v951, 16
    %v954 = vpop.permute.xlu0 %953
    %v956 = vadd.f32 %v946, %v954
    %v957 = vtanh.pop %v956
    %959 = vrot.lane.b32.xlu0 %v957, 16
    %v960 = vpop.permute.xlu0 %959
    %v962 = vmul.f32 %v944, %v960
    %v963 = vxor.u32 %v160, 2147483648
    %v964 = vmul.f32 %v963, 1.442695
    %v965 = vpow.pop %v964
    %v966 = vadd.f32 %v965, 1.0
    %v967 = vrcp.pop %v966
    %v968 = vmul.f32 1.0, %v967
    %v969 = vtanh.pop %v160
    %v970 = vmul.f32 %v968, 0.0
    %972 = vrot.lane.b32.xlu0 %v969, 80
    %v973 = vpop.permute.xlu0 %972
    %v975 = vmul.f32 %v968, %v973
    %977 = vrot.lane.b32.xlu0 %v975, 16
    %v978 = vpop.permute.xlu0 %977
    %v980 = vadd.f32 %v970, %v978
    %v981 = vtanh.pop %v980
    %983 = vrot.lane.b32.xlu0 %v981, 16
    %v984 = vpop.permute.xlu0 %983
    %v986 = vmul.f32 %v968, %v984
    %v987 = vld [vmem:[%s4] sm:$0xff]
    %v988 = vld [vmem:[%s4 + $0x8] sm:$0xff]
    %v989 = vld [vmem:[%s5] sm:$0xff]
    %v990 = vld [vmem:[%s5 + $0x8] sm:$0xff]
    %992 = vrot.lane.b32.xlu0 %v986, 32
    %v993 = vpop.permute.xlu0 %992
    %v994 = vsel %vm85, %v993, 0
    %996 = vmatprep.subr.mxu0 0.0
    %997 = vmatpush1.msra.mxu0 0.0
    %998 = vmatprep.subr.mxu0 0.0
    %999 = vmatpush1.msra.mxu0 0.0
    %1000 = vmatprep.subr.mxu0 0.0
    %1001 = vmatpush1.msra.mxu0 0.0
    %1002 = vmatprep.subr.mxu0 0.0
    %1003 = vmatpush1.msra.mxu0 0.0
    %1004 = vmatprep.subr.mxu0 0.0
    %1005 = vmatpush1.msra.mxu0 0.0
    %1006 = vmatprep.subr.mxu0 0.0
    %1007 = vmatpush1.msra.mxu0 0.0
    %1008 = vmatprep.subr.mxu0 0.0
    %1009 = vmatpush1.msra.mxu0 0.0
    %1010 = vmatprep.subr.mxu0 0.0
    %1011 = vmatpush1.msra.mxu0 0.0
    %1012 = vmatprep.subr.mxu0 0.0
    %1013 = vmatpush1.msra.mxu0 0.0
    %1014 = vmatprep.subr.mxu0 0.0
    %1015 = vmatpush1.msra.mxu0 0.0
    %1016 = vmatprep.subr.mxu0 0.0
    %1017 = vmatpush1.msra.mxu0 0.0
    %1018 = vmatprep.subr.mxu0 0.0
    %1019 = vmatpush1.msra.mxu0 0.0
    %1020 = vmatprep.subr.mxu0 0.0
    %1021 = vmatpush1.msra.mxu0 0.0
    %1022 = vmatprep.subr.mxu0 0.0
    %1023 = vmatpush1.msra.mxu0 0.0
    %1024 = vmatprep.subr.mxu0 0.0
    %1025 = vmatpush1.msra.mxu0 %v990
    %1026 = vmatprep.subr.mxu0 0.0
    %1027 = vmatpush1.msra.mxu0 %v989
    %1028 = vmatprep.subr.mxu0 0.0
    %1029 = vmatpush2.msra.mxu0 0.0
    %1030 = vmatprep.subr.mxu0 0.0
    %1031 = vmatpush2.msra.mxu0 0.0
    %1032 = vmatprep.subr.mxu0 0.0
    %1033 = vmatpush2.msra.mxu0 0.0
    %1034 = vmatprep.subr.mxu0 0.0
    %1035 = vmatpush2.msra.mxu0 0.0
    %1036 = vmatprep.subr.mxu0 0.0
    %1037 = vmatpush2.msra.mxu0 0.0
    %1038 = vmatprep.subr.mxu0 0.0
    %1039 = vmatpush2.msra.mxu0 0.0
    %1040 = vmatprep.subr.mxu0 0.0
    %1041 = vmatpush2.msra.mxu0 0.0
    %1042 = vmatprep.subr.mxu0 0.0
    %1043 = vmatpush2.msra.mxu0 0.0
    %1044 = vmatprep.subr.mxu0 0.0
    %1045 = vmatpush2.msra.mxu0 0.0
    %1046 = vmatprep.subr.mxu0 0.0
    %1047 = vmatpush2.msra.mxu0 0.0
    %1048 = vmatprep.subr.mxu0 0.0
    %1049 = vmatpush2.msra.mxu0 0.0
    %1050 = vmatprep.subr.mxu0 0.0
    %1051 = vmatpush2.msra.mxu0 0.0
    %1052 = vmatprep.subr.mxu0 0.0
    %1053 = vmatpush2.msra.mxu0 0.0
    %1054 = vmatprep.subr.mxu0 0.0
    %1055 = vmatpush2.msra.mxu0 0.0
    %1056 = vmatprep.subr.mxu0 0.0
    %1057 = vmatpush2.msra.mxu0 0.0
    %1058 = vmatprep.subr.mxu0 0.0
    %1059 = vmatpush2.msra.mxu0 0.0
    %1060 = vmatprep.mubr.f32.mxu0 0.0
    %1061 = vmatmul.mubr.f32.gmra.mxu0 %v994
    %v1062 = vpop.f32.mrf.mxu0
    %v1063 = vadd.f32 0.0, %v1062
    %v1064 = vpop.f32.mrf.mxu0
    %1065 = vdwg.mxu0
    %1067 = vrot.lane.b32.xlu0 %v962, 96
    %v1068 = vpop.permute.xlu0 %1067
    %v1069 = vsel %vm85, %v1068, 0
    %1071 = vmatprep.subr.mxu0 0.0
    %1072 = vmatpush1.msra.mxu0 0.0
    %1073 = vmatprep.subr.mxu0 0.0
    %1074 = vmatpush1.msra.mxu0 0.0
    %1075 = vmatprep.subr.mxu0 0.0
    %1076 = vmatpush1.msra.mxu0 0.0
    %1077 = vmatprep.subr.mxu0 0.0
    %1078 = vmatpush1.msra.mxu0 0.0
    %1079 = vmatprep.subr.mxu0 0.0
    %1080 = vmatpush1.msra.mxu0 0.0
    %1081 = vmatprep.subr.mxu0 0.0
    %1082 = vmatpush1.msra.mxu0 0.0
    %1083 = vmatprep.subr.mxu0 0.0
    %1084 = vmatpush1.msra.mxu0 0.0
    %1085 = vmatprep.subr.mxu0 0.0
    %1086 = vmatpush1.msra.mxu0 0.0
    %1087 = vmatprep.subr.mxu0 0.0
    %1088 = vmatpush1.msra.mxu0 0.0
    %1089 = vmatprep.subr.mxu0 0.0
    %1090 = vmatpush1.msra.mxu0 0.0
    %1091 = vmatprep.subr.mxu0 0.0
    %1092 = vmatpush1.msra.mxu0 0.0
    %1093 = vmatprep.subr.mxu0 0.0
    %1094 = vmatpush1.msra.mxu0 0.0
    %1095 = vmatprep.subr.mxu0 0.0
    %1096 = vmatpush1.msra.mxu0 0.0
    %1097 = vmatprep.subr.mxu0 0.0
    %1098 = vmatpush1.msra.mxu0 0.0
    %1099 = vmatprep.subr.mxu0 0.0
    %1100 = vmatpush1.msra.mxu0 %v988
    %1101 = vmatprep.subr.mxu0 0.0
    %1102 = vmatpush1.msra.mxu0 %v987
    %1103 = vmatprep.subr.mxu0 0.0
    %1104 = vmatpush2.msra.mxu0 0.0
    %1105 = vmatprep.subr.mxu0 0.0
    %1106 = vmatpush2.msra.mxu0 0.0
    %1107 = vmatprep.subr.mxu0 0.0
    %1108 = vmatpush2.msra.mxu0 0.0
    %1109 = vmatprep.subr.mxu0 0.0
    %1110 = vmatpush2.msra.mxu0 0.0
    %1111 = vmatprep.subr.mxu0 0.0
    %1112 = vmatpush2.msra.mxu0 0.0
    %1113 = vmatprep.subr.mxu0 0.0
    %1114 = vmatpush2.msra.mxu0 0.0
    %1115 = vmatprep.subr.mxu0 0.0
    %1116 = vmatpush2.msra.mxu0 0.0
    %1117 = vmatprep.subr.mxu0 0.0
    %1118 = vmatpush2.msra.mxu0 0.0
    %1119 = vmatprep.subr.mxu0 0.0
    %1120 = vmatpush2.msra.mxu0 0.0
    %1121 = vmatprep.subr.mxu0 0.0
    %1122 = vmatpush2.msra.mxu0 0.0
    %1123 = vmatprep.subr.mxu0 0.0
    %1124 = vmatpush2.msra.mxu0 0.0
    %1125 = vmatprep.subr.mxu0 0.0
    %1126 = vmatpush2.msra.mxu0 0.0
    %1127 = vmatprep.subr.mxu0 0.0
    %1128 = vmatpush2.msra.mxu0 0.0
    %1129 = vmatprep.subr.mxu0 0.0
    %1130 = vmatpush2.msra.mxu0 0.0
    %1131 = vmatprep.subr.mxu0 0.0
    %1132 = vmatpush2.msra.mxu0 0.0
    %1133 = vmatprep.subr.mxu0 0.0
    %1134 = vmatpush2.msra.mxu0 0.0
    %1135 = vmatprep.mubr.f32.mxu0 0.0
    %1136 = vmatmul.mubr.f32.gmra.mxu0 %v1069
    %v1137 = vpop.f32.mrf.mxu0
    %v1138 = vadd.f32 %v1063, %v1137
    %v1139 = vpop.f32.mrf.mxu0
    %1140 = vdwg.mxu0
    %v1141 = vld [vmem:[%s6] sm:$0x1]
    %v1143 = vlaneseq
    %v1144 = vshrl.u32 %v1143, 7
    %v1145 = vsub.s32 0, %v1144
    %v1146 = vrot.slane %v1141, %v1145
    %v1148 = vadd.f32 %v1138, %v1146
    %1149 = vmax.xlane.f32.xlu0 %v1148
    %v1150 = vpop.xlane.xlu0 %1149
    %v1151 = vsub.f32 %v1148, %v1150
    %v1152 = vmul.f32 %v1151, 1.442695
    %v1153 = vpow.pop %v1152
    %1154 = vadd.xlane.f32.xlu0 %v1153
    %v1155 = vpop.xlane.xlu0 %1154
    %v1156 = vlog2.pop %v1155
    %v1157 = vmul.f32 %v1156, 0.6931472
    %v1158 = vsub.f32 %v1151, %v1157
    %1159 = vst [vmem:[#allocation5] sm:$0xff] %v1158
    // Predicated region
    $region34: #{tpu_custom_call.1} parent=1 // pred_check
      _
    $region35: #{tpu_custom_call.1} parent=1 // pred_check_branch
      %1161 = sbr.rel (0) target = $region37
    $region36: #{tpu_custom_call.1} parent=1 // pred_region
      %s1163 = ssub.s32 128, 128
      %1164 = vsyncadd [#allocation4], %s1163
      %s1166 = sshll.u32 [#allocation5], 4
      %s1167 = int_to_ptr.vmem [resolvable:$true] %s1166
      %1169 = dma.vmem_to_hbm [thread:$0]  %s1167, 128, %s7, [#allocation4]
    $region37: #{tpu_custom_call.1} parent=1 // pred_fallthru
      _
    // Predicated region
    $region38: #{tpu_custom_call.1} parent=1 // pred_check
      _
    $region39: #{tpu_custom_call.1} parent=1 // pred_check_branch
      %1171 = sbr.rel (0) target = $region41
    $region40: #{tpu_custom_call.1} parent=1 // pred_region
      %1172 = dma.done [#allocation4], 128
    $region41: #{tpu_custom_call.1} parent=1 // pred_fallthru
      _
    %1173 = vsyncpa [#allocation3], 1
    %1174 = vsyncpa [#allocation4], 1

</llo_original>
